<compile_context>
chip_gen: v7x
topology: tpu7x:2x2x1
jax: 0.10.0
libtpu: 0.0.40
codegen_flags: <defaults>
</compile_context>

<pallas_src>
import functools

import jax
import jax.numpy as jnp
from jax.experimental import pallas as pl
from jax.experimental.pallas import tpu as pltpu

BN_EPS = 1e-5


def _bottleneck_kernel(x_ref, w1_ref, b1_ref, w2_ref, b2_ref, w3_ref, b3_ref,
                       o_ref, h1p_ref, *, H, W, planes):
    """Fused Bottleneck forward for one batch element.

    x_ref  : (H*W, Cin)          bf16, Cin == 4*planes
    w1_ref : (Cin, planes)       bf16  (conv1 1x1, BN1 scale folded in)
    b1_ref : (1, planes)         f32   (BN1 shift)
    w2_ref : (9*planes, planes)  bf16  (conv2 3x3 taps stacked on K, BN2 scale)
    b2_ref : (1, planes)         f32
    w3_ref : (planes, 4*planes)  bf16  (conv3 1x1, BN3 scale folded in)
    b3_ref : (1, 4*planes)       f32
    o_ref  : (H*W, 4*planes)     bf16
    h1p_ref: (H+2, W+2, planes)  bf16 VMEM scratch (zero-halo'd conv1 output)
    """
    # ---- conv1 (1x1) + bn1 + relu : one (H*W, Cin) @ (Cin, planes) matmul.
    x2d = x_ref[...]
    h1 = jnp.dot(x2d, w1_ref[...], preferred_element_type=jnp.float32)
    h1 = jnp.maximum(h1 + b1_ref[...], 0.0).astype(jnp.bfloat16)

    # ---- build the zero halo in the scratch (no concatenates / relayouts).
    # Border is re-zeroed every step: 4 tiny stores, and it stays correct even
    # when the batch grid is sharded across TensorCores (megacore).
    h1p_ref[0:1, :, :] = jnp.zeros((1, W + 2, planes), jnp.bfloat16)
    h1p_ref[H + 1:H + 2, :, :] = jnp.zeros((1, W + 2, planes), jnp.bfloat16)
    h1p_ref[:, 0:1, :] = jnp.zeros((H + 2, 1, planes), jnp.bfloat16)
    h1p_ref[:, W + 1:W + 2, :] = jnp.zeros((H + 2, 1, planes), jnp.bfloat16)
    h1p_ref[1:H + 1, 1:W + 1, :] = h1.reshape(H, W, planes)

    # ---- conv2 (3x3, stride=1, padding=1) + bn2 + relu as 9 accumulating
    # matmuls over shifted views of the halo scratch (no im2col slab).
    acc2 = None
    for t in range(9):
        dy, dx = divmod(t, 3)
        tap = h1p_ref[dy:dy + H, dx:dx + W, :].reshape(H * W, planes)
        part = jnp.dot(tap, w2_ref[t * planes:(t + 1) * planes, :],
                       preferred_element_type=jnp.float32)
        acc2 = part if acc2 is None else acc2 + part
    h2 = jnp.maximum(acc2 + b2_ref[...], 0.0).astype(jnp.bfloat16)

    # ---- conv3 (1x1) + bn3, identity residual, relu (f32), bf16 store.
    h3 = jnp.dot(h2, w3_ref[...], preferred_element_type=jnp.float32)
    out = jnp.maximum(h3 + b3_ref[...] + x2d.astype(jnp.float32), 0.0)
    o_ref[...] = out.astype(o_ref.dtype)


def _fold_bn(gamma, beta, mean, var):
    """Eval-mode BatchNorm -> per-channel (scale, shift)."""
    scale = gamma / jnp.sqrt(var + BN_EPS)
    shift = beta - mean * scale
    return scale, shift


def _prepare_params(params):
    """Fold BN into the conv weights and lay them out for the kernel."""
    (w1, bn1), (w2, bn2), (w3, bn3) = params
    planes = w1.shape[0]
    inplanes = w1.shape[1]

    s1, t1 = _fold_bn(*bn1)
    s2, t2 = _fold_bn(*bn2)
    s3, t3 = _fold_bn(*bn3)

    # conv1: (planes, inplanes, 1, 1) -> (inplanes, planes), BN1 scale folded.
    w1m = (w1[:, :, 0, 0].T * s1[None, :]).astype(jnp.bfloat16)
    # conv2: (planes, planes, 3, 3) -> (3,3,Cin,Cout) -> (9*planes, planes),
    # K index = (dy*3+dx)*planes + cin, matching the kernel's tap order.
    w2m = (jnp.transpose(w2, (2, 3, 1, 0)).reshape(9 * planes, planes)
           * s2[None, :]).astype(jnp.bfloat16)
    # conv3: (4*planes, planes, 1, 1) -> (planes, 4*planes), BN3 scale folded.
    w3m = (w3[:, :, 0, 0].T * s3[None, :]).astype(jnp.bfloat16)

    b1m = t1.reshape(1, planes).astype(jnp.float32)
    b2m = t2.reshape(1, planes).astype(jnp.float32)
    b3m = t3.reshape(1, 4 * planes).astype(jnp.float32)
    return inplanes, planes, (w1m, b1m, w2m, b2m, w3m, b3m)


def bottleneck_forward_nhwc(x_nhwc, params):
    """Bottleneck forward (stride=1, downsample=None).

    NHWC in, NHWC out, bf16 output.  This is the layout-transpose-free hot
    path: keep activations NHWC across consecutive blocks.
    """
    inplanes, planes, folded = _prepare_params(params)
    B, H, W, C = x_nhwc.shape
    assert C == inplanes == 4 * planes, "identity residual needs Cin == 4*planes"
    cout = 4 * planes

    # Lane-dense, reshape-free blocks: (B, H*W, C); the reshape is metadata-only.
    x_flat = x_nhwc.astype(jnp.bfloat16).reshape(B, H * W, C)

    # Rough per-step VMEM budget: double-buffered in/out blocks + resident
    # weights + halo scratch + f32 live intermediates.  Raise the scoped VMEM
    # limit only when the conservative defaults (16 MiB on v5e) are too small.
    est = (2 * H * W * C * 2 + 2 * H * W * cout * 2
           + (C * planes + 9 * planes * planes + planes * cout) * 2
           + (H + 2) * (W + 2) * planes * 2
           + 3 * H * W * max(planes, cout) * 4)
    vmem_limit = int(min(1.5 * est, 100 * 2 ** 20)) if est > 14 * 2 ** 20 else None

    kernel = functools.partial(_bottleneck_kernel, H=H, W=W, planes=planes)
    out_flat = pl.pallas_call(
        kernel,
        out_shape=jax.ShapeDtypeStruct((B, H * W, cout), jnp.bfloat16),
        grid_spec=pltpu.PrefetchScalarGridSpec(
            num_scalar_prefetch=0,
            grid=(B,),
            in_specs=[
                pl.BlockSpec((None, H * W, C), lambda b: (b, 0, 0)),
                pl.BlockSpec((C, planes), lambda b: (0, 0)),
                pl.BlockSpec((1, planes), lambda b: (0, 0)),
                pl.BlockSpec((9 * planes, planes), lambda b: (0, 0)),
                pl.BlockSpec((1, planes), lambda b: (0, 0)),
                pl.BlockSpec((planes, cout), lambda b: (0, 0)),
                pl.BlockSpec((1, cout), lambda b: (0, 0)),
            ],
            out_specs=pl.BlockSpec((None, H * W, cout), lambda b: (b, 0, 0)),
            scratch_shapes=[pltpu.VMEM((H + 2, W + 2, planes), jnp.bfloat16)],
        ),
        compiler_params=pltpu.CompilerParams(
            dimension_semantics=("parallel",),
            vmem_limit_bytes=vmem_limit),
    )(x_flat, *folded)
    return out_flat.reshape(B, H, W, cout)


def bottleneck_forward(x_nchw, params):
    """PyTorch-layout (NCHW) convenience wrapper.

    Casts to bf16 BEFORE the layout transpose (halves the transpose HBM
    traffic) and returns bf16 NCHW.  Prefer `bottleneck_forward_nhwc` and keep
    activations NHWC end-to-end across blocks.
    """
    x_nhwc = jnp.transpose(x_nchw.astype(jnp.bfloat16), (0, 2, 3, 1))
    out_nhwc = bottleneck_forward_nhwc(x_nhwc, params)
    return jnp.transpose(out_nhwc, (0, 3, 1, 2))


def _reference_forward(x_nchw, params):
    """Pure-JAX reference that mirrors the kernel's bf16 quantization points."""
    _, planes, (w1m, b1m, w2m, b2m, w3m, b3m) = _prepare_params(params)
    B, C, H, W = x_nchw.shape
    x = jnp.transpose(x_nchw, (0, 2, 3, 1)).astype(jnp.bfloat16).astype(jnp.float32)
    w1 = w1m.astype(jnp.float32)
    w2 = w2m.astype(jnp.float32)
    w3 = w3m.astype(jnp.float32)

    h1 = jnp.maximum(jnp.einsum('bhwc,cd->bhwd', x, w1) + b1m.reshape(-1), 0.0)
    h1 = h1.astype(jnp.bfloat16).astype(jnp.float32)
    h1p = jnp.pad(h1, ((0, 0), (1, 1), (1, 1), (0, 0)))
    acc = 0.0
    for t in range(9):
        dy, dx = divmod(t, 3)
        tap = h1p[:, dy:dy + H, dx:dx + W, :]
        acc = acc + jnp.einsum('bhwc,cd->bhwd', tap,
                               w2[t * planes:(t + 1) * planes, :])
    h2 = jnp.maximum(acc + b2m.reshape(-1), 0.0).astype(jnp.bfloat16).astype(jnp.float32)
    h3 = jnp.einsum('bhwc,cd->bhwd', h2, w3) + b3m.reshape(-1)
    out = jnp.maximum(h3 + x, 0.0).astype(jnp.bfloat16)
    return jnp.transpose(out, (0, 3, 1, 2))


def init_params(key, inplanes, planes):
    """Deterministic synthetic parameters matching the PyTorch module shapes."""
    def conv(k, cout, cin, ksize):
        fan_in = cin * ksize * ksize
        bound = 1.0 / jnp.sqrt(fan_in)
        return jax.random.uniform(k, (cout, cin, ksize, ksize), jnp.float32,
                                  -bound, bound)

    def bn(k, c):
        kg, kb, km, kv = jax.random.split(k, 4)
        gamma = jax.random.uniform(kg, (c,), jnp.float32, 0.5, 1.5)
        beta = jax.random.uniform(kb, (c,), jnp.float32, -0.5, 0.5)
        mean = 0.1 * jax.random.normal(km, (c,), jnp.float32)
        var = jax.random.uniform(kv, (c,), jnp.float32, 0.5, 1.5)
        return (gamma, beta, mean, var)

    k1, k2, k3, kb1, kb2, kb3 = jax.random.split(key, 6)
    return [
        (conv(k1, planes, inplanes, 1), bn(kb1, planes)),          # conv1/bn1
        (conv(k2, planes, planes, 3), bn(kb2, planes)),            # conv2/bn2
        (conv(k3, 4 * planes, planes, 1), bn(kb3, 4 * planes)),    # conv3/bn3
    ]


if __name__ == "__main__":
    # Small shapes consistent with the module: identity residual needs
    # inplanes == planes * expansion (= 4 * planes).
    B, planes, H, W = 2, 4, 8, 8
    inplanes = 4 * planes  # 16

    key = jax.random.PRNGKey(0)
    key, kx = jax.random.split(key)
    x = jax.random.normal(kx, (B, inplanes, H, W), jnp.float32)

    params = init_params(key, inplanes, planes)

    out = bottleneck_forward(x, params)
    out = jax.block_until_ready(out)

    assert out.shape == (B, 4 * planes, H, W), out.shape
    assert out.dtype == jnp.bfloat16, out.dtype

    # Silent correctness check (generous tolerance: bf16 activations/weights).
    ref = _reference_forward(x, params)
    max_err = float(jnp.max(jnp.abs(out.astype(jnp.float32)
                                    - ref.astype(jnp.float32))))
    assert max_err < 1e-1, max_err

    print("KERNEL_OK")
</pallas_src>

<mosaic_0001>
module attributes {stable_mosaic.version = 11 : i64} {
  func.func @_bottleneck_kernel(%arg0: i32, %arg1: memref<1x64x16xbf16, #tpu.memory_space<vmem>>, %arg2: memref<16x4xbf16, #tpu.memory_space<vmem>>, %arg3: memref<1x4xf32, #tpu.memory_space<vmem>>, %arg4: memref<36x4xbf16, #tpu.memory_space<vmem>>, %arg5: memref<1x4xf32, #tpu.memory_space<vmem>>, %arg6: memref<4x16xbf16, #tpu.memory_space<vmem>>, %arg7: memref<1x16xf32, #tpu.memory_space<vmem>>, %arg8: memref<1x64x16xbf16, #tpu.memory_space<vmem>>, %arg9: memref<10x10x4xbf16, #tpu.memory_space<vmem>>) attributes {dimension_semantics = [#tpu.dimension_semantics<parallel>], iteration_bounds = array<i64: 2>, scalar_prefetch = 0 : i64, scratch_operands = 1 : i64, tpu.core_type = #tpu.core_type<tc>, window_params = [{transform_indices = @transform_0, window_bounds = array<i64: 1, 64, 16>}, {pipeline_mode = #tpu.pipeline_mode<synchronous>, transform_indices = @transform_1, window_bounds = array<i64: 16, 4>}, {pipeline_mode = #tpu.pipeline_mode<synchronous>, transform_indices = @transform_2, window_bounds = array<i64: 1, 4>}, {pipeline_mode = #tpu.pipeline_mode<synchronous>, transform_indices = @transform_3, window_bounds = array<i64: 36, 4>}, {pipeline_mode = #tpu.pipeline_mode<synchronous>, transform_indices = @transform_4, window_bounds = array<i64: 1, 4>}, {pipeline_mode = #tpu.pipeline_mode<synchronous>, transform_indices = @transform_5, window_bounds = array<i64: 4, 16>}, {pipeline_mode = #tpu.pipeline_mode<synchronous>, transform_indices = @transform_6, window_bounds = array<i64: 1, 16>}, {transform_indices = @transform_7, window_bounds = array<i64: 1, 64, 16>}]} {
    %c0 = arith.constant 0 : index
    %c0_0 = arith.constant 0 : index
    %c0_1 = arith.constant 0 : index
    %0 = vector.load %arg1[%c0, %c0_0, %c0_1] : memref<1x64x16xbf16, #tpu.memory_space<vmem>>, vector<1x64x16xbf16>
    %1 = vector.shape_cast %0 : vector<1x64x16xbf16> to vector<64x16xbf16>
    %c0_2 = arith.constant 0 : index
    %c0_3 = arith.constant 0 : index
    %2 = vector.load %arg2[%c0_2, %c0_3] : memref<16x4xbf16, #tpu.memory_space<vmem>>, vector<16x4xbf16>
    %cst = arith.constant dense<0.000000e+00> : vector<64x4xf32>
    %3 = tpu.matmul %1, %2, %cst {dimension_numbers = #tpu.dot_dimension_numbers<[1], [0], [0], [1], [0, 0, 1, 1], [], []>} : vector<64x16xbf16>, vector<16x4xbf16>, vector<64x4xf32> -> vector<64x4xf32>
    %c0_4 = arith.constant 0 : index
    %c0_5 = arith.constant 0 : index
    %4 = vector.load %arg3[%c0_4, %c0_5] : memref<1x4xf32, #tpu.memory_space<vmem>>, vector<1x4xf32>
    %5 = vector.broadcast %4 : vector<1x4xf32> to vector<64x4xf32>
    %6 = arith.addf %3, %5 : vector<64x4xf32>
    %cst_6 = arith.constant 0.000000e+00 : f32
    %7 = vector.broadcast %cst_6 : f32 to vector<64x4xf32>
    %8 = arith.maximumf %6, %7 : vector<64x4xf32>
    %9 = arith.truncf %8 : vector<64x4xf32> to vector<64x4xbf16>
    %cst_7 = arith.constant 0.000000e+00 : bf16
    %10 = vector.broadcast %cst_7 : bf16 to vector<1x10x4xbf16>
    %c0_8 = arith.constant 0 : index
    %c0_9 = arith.constant 0 : index
    %c0_10 = arith.constant 0 : index
    %11 = vector.load %arg9[%c0_8, %c0_9, %c0_10] : memref<10x10x4xbf16, #tpu.memory_space<vmem>>, vector<1x10x4xbf16>
    tpu.vector_store %arg9[%c0_8, %c0_9, %c0_10], %10 {strides = array<i32>} : memref<10x10x4xbf16, #tpu.memory_space<vmem>>, vector<1x10x4xbf16>,
    %cst_11 = arith.constant 0.000000e+00 : bf16
    %12 = vector.broadcast %cst_11 : bf16 to vector<1x10x4xbf16>
    %c9 = arith.constant 9 : index
    %c0_12 = arith.constant 0 : index
    %c0_13 = arith.constant 0 : index
    %13 = vector.load %arg9[%c9, %c0_12, %c0_13] : memref<10x10x4xbf16, #tpu.memory_space<vmem>>, vector<1x10x4xbf16>
    tpu.vector_store %arg9[%c9, %c0_12, %c0_13], %12 {strides = array<i32>} : memref<10x10x4xbf16, #tpu.memory_space<vmem>>, vector<1x10x4xbf16>,
    %cst_14 = arith.constant 0.000000e+00 : bf16
    %14 = vector.broadcast %cst_14 : bf16 to vector<10x1x4xbf16>
    %c0_15 = arith.constant 0 : index
    %c0_16 = arith.constant 0 : index
    %c0_17 = arith.constant 0 : index
    %15 = vector.load %arg9[%c0_15, %c0_16, %c0_17] : memref<10x10x4xbf16, #tpu.memory_space<vmem>>, vector<10x1x4xbf16>
    tpu.vector_store %arg9[%c0_15, %c0_16, %c0_17], %14 {strides = array<i32>} : memref<10x10x4xbf16, #tpu.memory_space<vmem>>, vector<10x1x4xbf16>,
    %cst_18 = arith.constant 0.000000e+00 : bf16
    %16 = vector.broadcast %cst_18 : bf16 to vector<10x1x4xbf16>
    %c0_19 = arith.constant 0 : index
    %c9_20 = arith.constant 9 : index
    %c0_21 = arith.constant 0 : index
    %17 = vector.load %arg9[%c0_19, %c9_20, %c0_21] : memref<10x10x4xbf16, #tpu.memory_space<vmem>>, vector<10x1x4xbf16>
    tpu.vector_store %arg9[%c0_19, %c9_20, %c0_21], %16 {strides = array<i32>} : memref<10x10x4xbf16, #tpu.memory_space<vmem>>, vector<10x1x4xbf16>,
    %18 = vector.shape_cast %9 : vector<64x4xbf16> to vector<8x8x4xbf16>
    %c1 = arith.constant 1 : index
    %c1_22 = arith.constant 1 : index
    %c0_23 = arith.constant 0 : index
    %19 = vector.load %arg9[%c1, %c1_22, %c0_23] : memref<10x10x4xbf16, #tpu.memory_space<vmem>>, vector<8x8x4xbf16>
    tpu.vector_store %arg9[%c1, %c1_22, %c0_23], %18 {strides = array<i32>} : memref<10x10x4xbf16, #tpu.memory_space<vmem>>, vector<8x8x4xbf16>,
    %c0_24 = arith.constant 0 : index
    %c0_25 = arith.constant 0 : index
    %c0_26 = arith.constant 0 : index
    %20 = vector.load %arg9[%c0_24, %c0_25, %c0_26] : memref<10x10x4xbf16, #tpu.memory_space<vmem>>, vector<8x8x4xbf16>
    %21 = vector.shape_cast %20 : vector<8x8x4xbf16> to vector<64x4xbf16>
    %c0_27 = arith.constant 0 : index
    %c0_28 = arith.constant 0 : index
    %22 = vector.load %arg4[%c0_27, %c0_28] : memref<36x4xbf16, #tpu.memory_space<vmem>>, vector<4x4xbf16>
    %cst_29 = arith.constant dense<0.000000e+00> : vector<64x4xf32>
    %23 = tpu.matmul %21, %22, %cst_29 {dimension_numbers = #tpu.dot_dimension_numbers<[1], [0], [0], [1], [0, 0, 1, 1], [], []>} : vector<64x4xbf16>, vector<4x4xbf16>, vector<64x4xf32> -> vector<64x4xf32>
    %c0_30 = arith.constant 0 : index
    %c1_31 = arith.constant 1 : index
    %c0_32 = arith.constant 0 : index
    %24 = vector.load %arg9[%c0_30, %c1_31, %c0_32] : memref<10x10x4xbf16, #tpu.memory_space<vmem>>, vector<8x8x4xbf16>
    %25 = vector.shape_cast %24 : vector<8x8x4xbf16> to vector<64x4xbf16>
    %c4 = arith.constant 4 : index
    %c0_33 = arith.constant 0 : index
    %26 = vector.load %arg4[%c4, %c0_33] : memref<36x4xbf16, #tpu.memory_space<vmem>>, vector<4x4xbf16>
    %cst_34 = arith.constant dense<0.000000e+00> : vector<64x4xf32>
    %27 = tpu.matmul %25, %26, %cst_34 {dimension_numbers = #tpu.dot_dimension_numbers<[1], [0], [0], [1], [0, 0, 1, 1], [], []>} : vector<64x4xbf16>, vector<4x4xbf16>, vector<64x4xf32> -> vector<64x4xf32>
    %28 = arith.addf %23, %27 : vector<64x4xf32>
    %c0_35 = arith.constant 0 : index
    %c2 = arith.constant 2 : index
    %c0_36 = arith.constant 0 : index
    %29 = vector.load %arg9[%c0_35, %c2, %c0_36] : memref<10x10x4xbf16, #tpu.memory_space<vmem>>, vector<8x8x4xbf16>
    %30 = vector.shape_cast %29 : vector<8x8x4xbf16> to vector<64x4xbf16>
    %c8 = arith.constant 8 : index
    %c0_37 = arith.constant 0 : index
    %31 = vector.load %arg4[%c8, %c0_37] : memref<36x4xbf16, #tpu.memory_space<vmem>>, vector<4x4xbf16>
    %cst_38 = arith.constant dense<0.000000e+00> : vector<64x4xf32>
    %32 = tpu.matmul %30, %31, %cst_38 {dimension_numbers = #tpu.dot_dimension_numbers<[1], [0], [0], [1], [0, 0, 1, 1], [], []>} : vector<64x4xbf16>, vector<4x4xbf16>, vector<64x4xf32> -> vector<64x4xf32>
    %33 = arith.addf %28, %32 : vector<64x4xf32>
    %c1_39 = arith.constant 1 : index
    %c0_40 = arith.constant 0 : index
    %c0_41 = arith.constant 0 : index
    %34 = vector.load %arg9[%c1_39, %c0_40, %c0_41] : memref<10x10x4xbf16, #tpu.memory_space<vmem>>, vector<8x8x4xbf16>
    %35 = vector.shape_cast %34 : vector<8x8x4xbf16> to vector<64x4xbf16>
    %c12 = arith.constant 12 : index
    %c0_42 = arith.constant 0 : index
    %36 = vector.load %arg4[%c12, %c0_42] : memref<36x4xbf16, #tpu.memory_space<vmem>>, vector<4x4xbf16>
    %cst_43 = arith.constant dense<0.000000e+00> : vector<64x4xf32>
    %37 = tpu.matmul %35, %36, %cst_43 {dimension_numbers = #tpu.dot_dimension_numbers<[1], [0], [0], [1], [0, 0, 1, 1], [], []>} : vector<64x4xbf16>, vector<4x4xbf16>, vector<64x4xf32> -> vector<64x4xf32>
    %38 = arith.addf %33, %37 : vector<64x4xf32>
    %c1_44 = arith.constant 1 : index
    %c1_45 = arith.constant 1 : index
    %c0_46 = arith.constant 0 : index
    %39 = vector.load %arg9[%c1_44, %c1_45, %c0_46] : memref<10x10x4xbf16, #tpu.memory_space<vmem>>, vector<8x8x4xbf16>
    %40 = vector.shape_cast %39 : vector<8x8x4xbf16> to vector<64x4xbf16>
    %c16 = arith.constant 16 : index
    %c0_47 = arith.constant 0 : index
    %41 = vector.load %arg4[%c16, %c0_47] : memref<36x4xbf16, #tpu.memory_space<vmem>>, vector<4x4xbf16>
    %cst_48 = arith.constant dense<0.000000e+00> : vector<64x4xf32>
    %42 = tpu.matmul %40, %41, %cst_48 {dimension_numbers = #tpu.dot_dimension_numbers<[1], [0], [0], [1], [0, 0, 1, 1], [], []>} : vector<64x4xbf16>, vector<4x4xbf16>, vector<64x4xf32> -> vector<64x4xf32>
    %43 = arith.addf %38, %42 : vector<64x4xf32>
    %c1_49 = arith.constant 1 : index
    %c2_50 = arith.constant 2 : index
    %c0_51 = arith.constant 0 : index
    %44 = vector.load %arg9[%c1_49, %c2_50, %c0_51] : memref<10x10x4xbf16, #tpu.memory_space<vmem>>, vector<8x8x4xbf16>
    %45 = vector.shape_cast %44 : vector<8x8x4xbf16> to vector<64x4xbf16>
    %c20 = arith.constant 20 : index
    %c0_52 = arith.constant 0 : index
    %46 = vector.load %arg4[%c20, %c0_52] : memref<36x4xbf16, #tpu.memory_space<vmem>>, vector<4x4xbf16>
    %cst_53 = arith.constant dense<0.000000e+00> : vector<64x4xf32>
    %47 = tpu.matmul %45, %46, %cst_53 {dimension_numbers = #tpu.dot_dimension_numbers<[1], [0], [0], [1], [0, 0, 1, 1], [], []>} : vector<64x4xbf16>, vector<4x4xbf16>, vector<64x4xf32> -> vector<64x4xf32>
    %48 = arith.addf %43, %47 : vector<64x4xf32>
    %c2_54 = arith.constant 2 : index
    %c0_55 = arith.constant 0 : index
    %c0_56 = arith.constant 0 : index
    %49 = vector.load %arg9[%c2_54, %c0_55, %c0_56] : memref<10x10x4xbf16, #tpu.memory_space<vmem>>, vector<8x8x4xbf16>
    %50 = vector.shape_cast %49 : vector<8x8x4xbf16> to vector<64x4xbf16>
    %c24 = arith.constant 24 : index
    %c0_57 = arith.constant 0 : index
    %51 = vector.load %arg4[%c24, %c0_57] : memref<36x4xbf16, #tpu.memory_space<vmem>>, vector<4x4xbf16>
    %cst_58 = arith.constant dense<0.000000e+00> : vector<64x4xf32>
    %52 = tpu.matmul %50, %51, %cst_58 {dimension_numbers = #tpu.dot_dimension_numbers<[1], [0], [0], [1], [0, 0, 1, 1], [], []>} : vector<64x4xbf16>, vector<4x4xbf16>, vector<64x4xf32> -> vector<64x4xf32>
    %53 = arith.addf %48, %52 : vector<64x4xf32>
    %c2_59 = arith.constant 2 : index
    %c1_60 = arith.constant 1 : index
    %c0_61 = arith.constant 0 : index
    %54 = vector.load %arg9[%c2_59, %c1_60, %c0_61] : memref<10x10x4xbf16, #tpu.memory_space<vmem>>, vector<8x8x4xbf16>
    %55 = vector.shape_cast %54 : vector<8x8x4xbf16> to vector<64x4xbf16>
    %c28 = arith.constant 28 : index
    %c0_62 = arith.constant 0 : index
    %56 = vector.load %arg4[%c28, %c0_62] : memref<36x4xbf16, #tpu.memory_space<vmem>>, vector<4x4xbf16>
    %cst_63 = arith.constant dense<0.000000e+00> : vector<64x4xf32>
    %57 = tpu.matmul %55, %56, %cst_63 {dimension_numbers = #tpu.dot_dimension_numbers<[1], [0], [0], [1], [0, 0, 1, 1], [], []>} : vector<64x4xbf16>, vector<4x4xbf16>, vector<64x4xf32> -> vector<64x4xf32>
    %58 = arith.addf %53, %57 : vector<64x4xf32>
    %c2_64 = arith.constant 2 : index
    %c2_65 = arith.constant 2 : index
    %c0_66 = arith.constant 0 : index
    %59 = vector.load %arg9[%c2_64, %c2_65, %c0_66] : memref<10x10x4xbf16, #tpu.memory_space<vmem>>, vector<8x8x4xbf16>
    %60 = vector.shape_cast %59 : vector<8x8x4xbf16> to vector<64x4xbf16>
    %c32 = arith.constant 32 : index
    %c0_67 = arith.constant 0 : index
    %61 = vector.load %arg4[%c32, %c0_67] : memref<36x4xbf16, #tpu.memory_space<vmem>>, vector<4x4xbf16>
    %cst_68 = arith.constant dense<0.000000e+00> : vector<64x4xf32>
    %62 = tpu.matmul %60, %61, %cst_68 {dimension_numbers = #tpu.dot_dimension_numbers<[1], [0], [0], [1], [0, 0, 1, 1], [], []>} : vector<64x4xbf16>, vector<4x4xbf16>, vector<64x4xf32> -> vector<64x4xf32>
    %63 = arith.addf %58, %62 : vector<64x4xf32>
    %c0_69 = arith.constant 0 : index
    %c0_70 = arith.constant 0 : index
    %64 = vector.load %arg5[%c0_69, %c0_70] : memref<1x4xf32, #tpu.memory_space<vmem>>, vector<1x4xf32>
    %65 = vector.broadcast %64 : vector<1x4xf32> to vector<64x4xf32>
    %66 = arith.addf %63, %65 : vector<64x4xf32>
    %cst_71 = arith.constant 0.000000e+00 : f32
    %67 = vector.broadcast %cst_71 : f32 to vector<64x4xf32>
    %68 = arith.maximumf %66, %67 : vector<64x4xf32>
    %69 = arith.truncf %68 : vector<64x4xf32> to vector<64x4xbf16>
    %c0_72 = arith.constant 0 : index
    %c0_73 = arith.constant 0 : index
    %70 = vector.load %arg6[%c0_72, %c0_73] : memref<4x16xbf16, #tpu.memory_space<vmem>>, vector<4x16xbf16>
    %cst_74 = arith.constant dense<0.000000e+00> : vector<64x16xf32>
    %71 = tpu.matmul %69, %70, %cst_74 {dimension_numbers = #tpu.dot_dimension_numbers<[1], [0], [0], [1], [0, 0, 1, 1], [], []>} : vector<64x4xbf16>, vector<4x16xbf16>, vector<64x16xf32> -> vector<64x16xf32>
    %c0_75 = arith.constant 0 : index
    %c0_76 = arith.constant 0 : index
    %72 = vector.load %arg7[%c0_75, %c0_76] : memref<1x16xf32, #tpu.memory_space<vmem>>, vector<1x16xf32>
    %73 = vector.broadcast %72 : vector<1x16xf32> to vector<64x16xf32>
    %74 = arith.addf %71, %73 : vector<64x16xf32>
    %75 = arith.extf %1 : vector<64x16xbf16> to vector<64x16xf32>
    %76 = arith.addf %74, %75 : vector<64x16xf32>
    %cst_77 = arith.constant 0.000000e+00 : f32
    %77 = vector.broadcast %cst_77 : f32 to vector<64x16xf32>
    %78 = arith.maximumf %76, %77 : vector<64x16xf32>
    %79 = arith.truncf %78 : vector<64x16xf32> to vector<64x16xbf16>
    %c0_78 = arith.constant 0 : index
    %c0_79 = arith.constant 0 : index
    %c0_80 = arith.constant 0 : index
    %80 = vector.load %arg8[%c0_78, %c0_79, %c0_80] : memref<1x64x16xbf16, #tpu.memory_space<vmem>>, vector<1x64x16xbf16>
    %81 = vector.shape_cast %80 : vector<1x64x16xbf16> to vector<64x16xbf16>
    %82 = vector.shape_cast %79 : vector<64x16xbf16> to vector<1x64x16xbf16>
    tpu.vector_store %arg8[%c0_78, %c0_79, %c0_80], %82 {strides = array<i32>} : memref<1x64x16xbf16, #tpu.memory_space<vmem>>, vector<1x64x16xbf16>,
    return
  }
  func.func @transform_0(%arg0: i32) -> (i32, i32, i32) {
    %c0_i32 = arith.constant 0 : i32
    %c0_i32_0 = arith.constant 0 : i32
    %c0_i32_1 = arith.constant 0 : i32
    return %arg0, %c0_i32, %c0_i32_0 : i32, i32, i32
  }
  func.func @transform_1(%arg0: i32) -> (i32, i32) {
    %c0_i32 = arith.constant 0 : i32
    %c0_i32_0 = arith.constant 0 : i32
    %c0_i32_1 = arith.constant 0 : i32
    return %c0_i32, %c0_i32_0 : i32, i32
  }
  func.func @transform_2(%arg0: i32) -> (i32, i32) {
    %c0_i32 = arith.constant 0 : i32
    %c0_i32_0 = arith.constant 0 : i32
    %c0_i32_1 = arith.constant 0 : i32
    return %c0_i32, %c0_i32_0 : i32, i32
  }
  func.func @transform_3(%arg0: i32) -> (i32, i32) {
    %c0_i32 = arith.constant 0 : i32
    %c0_i32_0 = arith.constant 0 : i32
    %c0_i32_1 = arith.constant 0 : i32
    return %c0_i32, %c0_i32_0 : i32, i32
  }
  func.func @transform_4(%arg0: i32) -> (i32, i32) {
    %c0_i32 = arith.constant 0 : i32
    %c0_i32_0 = arith.constant 0 : i32
    %c0_i32_1 = arith.constant 0 : i32
    return %c0_i32, %c0_i32_0 : i32, i32
  }
  func.func @transform_5(%arg0: i32) -> (i32, i32) {
    %c0_i32 = arith.constant 0 : i32
    %c0_i32_0 = arith.constant 0 : i32
    %c0_i32_1 = arith.constant 0 : i32
    return %c0_i32, %c0_i32_0 : i32, i32
  }
  func.func @transform_6(%arg0: i32) -> (i32, i32) {
    %c0_i32 = arith.constant 0 : i32
    %c0_i32_0 = arith.constant 0 : i32
    %c0_i32_1 = arith.constant 0 : i32
    return %c0_i32, %c0_i32_0 : i32, i32
  }
  func.func @transform_7(%arg0: i32) -> (i32, i32, i32) {
    %c0_i32 = arith.constant 0 : i32
    %c0_i32_0 = arith.constant 0 : i32
    %c0_i32_1 = arith.constant 0 : i32
    return %arg0, %c0_i32, %c0_i32_0 : i32, i32, i32
  }
}

</mosaic_0001>

<llo_original>
// kernel: tpu_custom_call.1
$region0: #{tpu_custom_call.1}
  #allocation0 [shape = 'u32[]', space=smem, size = 0x4, offset = 0x4, fixed_abs, tag = 'smem constant byte address 0x4 - core index']
  #allocation1 [shape = 'u32[144,128]{1,0:T(1,128)}', space=vmem, size = 0x12000, scoped, tag = 'internal scratch']
  #allocation2 [shape = 'bf16[10,10,4]{2,1,0:T(8,128)(2,1)}', space=vmem, size = 0xa000, scoped, tag = 'scratch operand']
  %s0 = inlined_call_operand.vmem [shape: bf16[2,64,16], index: 0, kind: input, shape index: {}]
  %s1 = inlined_call_operand.vmem [shape: bf16[16,4], index: 1, kind: input, shape index: {}]
  %s2 = inlined_call_operand.vmem [shape: f32[1,4], index: 2, kind: input, shape index: {}]
  %s3 = inlined_call_operand.vmem [shape: bf16[36,4], index: 3, kind: input, shape index: {}]
  %s4 = inlined_call_operand.vmem [shape: f32[1,4], index: 4, kind: input, shape index: {}]
  %s5 = inlined_call_operand.vmem [shape: bf16[4,16], index: 5, kind: input, shape index: {}]
  %s6 = inlined_call_operand.vmem [shape: f32[1,16], index: 6, kind: input, shape index: {}]
  %s7 = inlined_call_operand.vmem [shape: bf16[2,64,16], index: 7, kind: output, shape index: {}]
  %s8 = sld [smem:[#allocation0]]
  $region61: #{tpu_custom_call.1} parent=0
    _
  %s10 = ssub.s32 1, %s8
  %s11 = scalar_select 0, %s10, %s8
  loop: start=0, step=1, limit=4
  $region2: #{tpu_custom_call.1} parent=0 // loop_pre_header
    _
  $region3: #{tpu_custom_call.1} parent=0 // loop_header
    %s13 = sphi 0, %s17
    %p14 = scmp.ge.s32.totalorder %s13, 4
    %s23 = sphi 0, %s25
    %s26 = sphi 0, %s23
    %s27 = sphi 0, %s26
    %s43 = sphi 0, %s27
    %s47 = sphi 0, %s47
    %s49 = sphi 0, %s47
    %s50 = sphi 0, %s49
    %s64 = sphi 0, %s50
    %s68 = sphi 0, %s68
    %s70 = sphi 0, %s68
    %s71 = sphi 0, %s70
    %s85 = sphi 0, %s71
    %s89 = sphi 0, %s89
    %s91 = sphi 0, %s89
    %s92 = sphi 0, %s91
    %s106 = sphi 0, %s92
    %s110 = sphi 0, %s110
    %s112 = sphi 0, %s110
    %s113 = sphi 0, %s112
    %s127 = sphi 0, %s113
    %s131 = sphi 0, %s131
    %s133 = sphi 0, %s131
    %s134 = sphi 0, %s133
    %s148 = sphi 0, %s134
    %s152 = sphi 0, %s152
    %s154 = sphi 0, %s152
    %s155 = sphi 0, %s154
    %s169 = sphi 0, %s155
    %s175 = sphi 0, %s177
    %s178 = sphi 0, %s175
    %s179 = sphi 0, %s178
    %s195 = sphi 0, %s179
  $region4: #{tpu_custom_call.1} parent=0 // loop_header_branch
    %16 = sbr.rel (%p14) target = $region8
  $region5: #{tpu_custom_call.1} parent=0 // loop_body
    %s18 = ssub.s32 %s13, 1
    %s19 = ssub.s32 %s13, 2
    %s20 = sadd.s32 %s13, 1
    %s21 = ssub.s32 %s13, %s20
    %p22 = scmp.eq.s32.totalorder %s21, 0
    %s24 = sadd.s32 %s23, 1
    %s25 = scalar_select %p22, %s23, %s24
    %p28 = pneg %p22
    %p29 = scmp.eq.s32.totalorder %s13, 1
    %p30 = por %p28, %p29
    %p31 = scmp.ne.s32.totalorder %s23, %s26
    %p32 = scmp.eq.s32.totalorder %s13, 0
    %p33 = por %p31, %p32
    %p34 = scmp.ne.s32.totalorder %s23, %s26
    %p35 = scmp.eq.s32.totalorder %s18, 1
    %p36 = por %p34, %p35
    %p37 = scmp.ne.s32.totalorder %s26, %s27
    %p38 = scmp.eq.s32.totalorder %s18, 0
    %p39 = por %p37, %p38
    %p40 = scmp.ne.s32.totalorder %s26, %s27
    %p41 = scmp.eq.s32.totalorder %s19, 1
    %p42 = por %p40, %p41
    %p44 = scmp.ne.s32.totalorder %s27, %s43
    %p45 = scmp.eq.s32.totalorder %s19, 0
    %p46 = por %p44, %p45
    %s48 = sadd.s32 %s47, 1
    %p51 = scmp.eq.s32.totalorder %s13, 1
    %p52 = scmp.ne.s32.totalorder %s47, %s49
    %p53 = scmp.eq.s32.totalorder %s13, 0
    %p54 = por %p52, %p53
    %p55 = scmp.ne.s32.totalorder %s47, %s49
    %p56 = scmp.eq.s32.totalorder %s18, 1
    %p57 = por %p55, %p56
    %p58 = scmp.ne.s32.totalorder %s49, %s50
    %p59 = scmp.eq.s32.totalorder %s18, 0
    %p60 = por %p58, %p59
    %p61 = scmp.ne.s32.totalorder %s49, %s50
    %p62 = scmp.eq.s32.totalorder %s19, 1
    %p63 = por %p61, %p62
    %p65 = scmp.ne.s32.totalorder %s50, %s64
    %p66 = scmp.eq.s32.totalorder %s19, 0
    %p67 = por %p65, %p66
    %s69 = sadd.s32 %s68, 1
    %p72 = scmp.eq.s32.totalorder %s13, 1
    %p73 = scmp.ne.s32.totalorder %s68, %s70
    %p74 = scmp.eq.s32.totalorder %s13, 0
    %p75 = por %p73, %p74
    %p76 = scmp.ne.s32.totalorder %s68, %s70
    %p77 = scmp.eq.s32.totalorder %s18, 1
    %p78 = por %p76, %p77
    %p79 = scmp.ne.s32.totalorder %s70, %s71
    %p80 = scmp.eq.s32.totalorder %s18, 0
    %p81 = por %p79, %p80
    %p82 = scmp.ne.s32.totalorder %s70, %s71
    %p83 = scmp.eq.s32.totalorder %s19, 1
    %p84 = por %p82, %p83
    %p86 = scmp.ne.s32.totalorder %s71, %s85
    %p87 = scmp.eq.s32.totalorder %s19, 0
    %p88 = por %p86, %p87
    %s90 = sadd.s32 %s89, 1
    %p93 = scmp.eq.s32.totalorder %s13, 1
    %p94 = scmp.ne.s32.totalorder %s89, %s91
    %p95 = scmp.eq.s32.totalorder %s13, 0
    %p96 = por %p94, %p95
    %p97 = scmp.ne.s32.totalorder %s89, %s91
    %p98 = scmp.eq.s32.totalorder %s18, 1
    %p99 = por %p97, %p98
    %p100 = scmp.ne.s32.totalorder %s91, %s92
    %p101 = scmp.eq.s32.totalorder %s18, 0
    %p102 = por %p100, %p101
    %p103 = scmp.ne.s32.totalorder %s91, %s92
    %p104 = scmp.eq.s32.totalorder %s19, 1
    %p105 = por %p103, %p104
    %p107 = scmp.ne.s32.totalorder %s92, %s106
    %p108 = scmp.eq.s32.totalorder %s19, 0
    %p109 = por %p107, %p108
    %s111 = sadd.s32 %s110, 1
    %p114 = scmp.eq.s32.totalorder %s13, 1
    %p115 = scmp.ne.s32.totalorder %s110, %s112
    %p116 = scmp.eq.s32.totalorder %s13, 0
    %p117 = por %p115, %p116
    %p118 = scmp.ne.s32.totalorder %s110, %s112
    %p119 = scmp.eq.s32.totalorder %s18, 1
    %p120 = por %p118, %p119
    %p121 = scmp.ne.s32.totalorder %s112, %s113
    %p122 = scmp.eq.s32.totalorder %s18, 0
    %p123 = por %p121, %p122
    %p124 = scmp.ne.s32.totalorder %s112, %s113
    %p125 = scmp.eq.s32.totalorder %s19, 1
    %p126 = por %p124, %p125
    %p128 = scmp.ne.s32.totalorder %s113, %s127
    %p129 = scmp.eq.s32.totalorder %s19, 0
    %p130 = por %p128, %p129
    %s132 = sadd.s32 %s131, 1
    %p135 = scmp.eq.s32.totalorder %s13, 1
    %p136 = scmp.ne.s32.totalorder %s131, %s133
    %p137 = scmp.eq.s32.totalorder %s13, 0
    %p138 = por %p136, %p137
    %p139 = scmp.ne.s32.totalorder %s131, %s133
    %p140 = scmp.eq.s32.totalorder %s18, 1
    %p141 = por %p139, %p140
    %p142 = scmp.ne.s32.totalorder %s133, %s134
    %p143 = scmp.eq.s32.totalorder %s18, 0
    %p144 = por %p142, %p143
    %p145 = scmp.ne.s32.totalorder %s133, %s134
    %p146 = scmp.eq.s32.totalorder %s19, 1
    %p147 = por %p145, %p146
    %p149 = scmp.ne.s32.totalorder %s134, %s148
    %p150 = scmp.eq.s32.totalorder %s19, 0
    %p151 = por %p149, %p150
    %s153 = sadd.s32 %s152, 1
    %p156 = scmp.eq.s32.totalorder %s13, 1
    %p157 = scmp.ne.s32.totalorder %s152, %s154
    %p158 = scmp.eq.s32.totalorder %s13, 0
    %p159 = por %p157, %p158
    %p160 = scmp.ne.s32.totalorder %s152, %s154
    %p161 = scmp.eq.s32.totalorder %s18, 1
    %p162 = por %p160, %p161
    %p163 = scmp.ne.s32.totalorder %s154, %s155
    %p164 = scmp.eq.s32.totalorder %s18, 0
    %p165 = por %p163, %p164
    %p166 = scmp.ne.s32.totalorder %s154, %s155
    %p167 = scmp.eq.s32.totalorder %s19, 1
    %p168 = por %p166, %p167
    %p170 = scmp.ne.s32.totalorder %s155, %s169
    %p171 = scmp.eq.s32.totalorder %s19, 0
    %p172 = por %p170, %p171
    %s173 = ssub.s32 %s13, %s20
    %p174 = scmp.eq.s32.totalorder %s173, 0
    %s176 = sadd.s32 %s175, 1
    %s177 = scalar_select %p174, %s175, %s176
    %p180 = pneg %p174
    %p181 = scmp.eq.s32.totalorder %s13, 1
    %p182 = por %p180, %p181
    %p183 = scmp.ne.s32.totalorder %s175, %s178
    %p184 = scmp.eq.s32.totalorder %s13, 0
    %p185 = por %p183, %p184
    %p186 = scmp.ne.s32.totalorder %s175, %s178
    %p187 = scmp.eq.s32.totalorder %s18, 1
    %p188 = por %p186, %p187
    %p189 = scmp.ne.s32.totalorder %s178, %s179
    %p190 = scmp.eq.s32.totalorder %s18, 0
    %p191 = por %p189, %p190
    %p192 = scmp.ne.s32.totalorder %s178, %s179
    %p193 = scmp.eq.s32.totalorder %s19, 1
    %p194 = por %p192, %p193
    %p196 = scmp.ne.s32.totalorder %s179, %s195
    %p197 = scmp.eq.s32.totalorder %s19, 0
    %p198 = por %p196, %p197
    %p199 = scmp.le.s32.totalorder 1, %s13
    %p200 = scmp.lt.s32.totalorder %s13, 3
    %p201 = pnand %p199, %p200
    %p202 = pneg %p201
    // Predicated region
    $region9: #{tpu_custom_call.1} parent=5 // pred_check
      _
    $region10: #{tpu_custom_call.1} parent=5 // pred_check_branch
      %204 = sbr.rel (%p201) target = $region12
    $region11: #{tpu_custom_call.1} parent=5 // pred_region
      %s205 = ssub.s32 %s13, 1
      // Predicated region
      $region13: #{tpu_custom_call.1} parent=11 // pred_check
        %p206 = pneg %p60
      $region14: #{tpu_custom_call.1} parent=11 // pred_check_branch
        %208 = sbr.rel (%p206) target = $region16
      $region15: #{tpu_custom_call.1} parent=11 // pred_region
        _
      $region16: #{tpu_custom_call.1} parent=11 // pred_fallthru
        _
      // Predicated region
      $region17: #{tpu_custom_call.1} parent=11 // pred_check
        %p209 = pneg %p81
      $region18: #{tpu_custom_call.1} parent=11 // pred_check_branch
        %211 = sbr.rel (%p209) target = $region20
      $region19: #{tpu_custom_call.1} parent=11 // pred_region
        _
      $region20: #{tpu_custom_call.1} parent=11 // pred_fallthru
        _
      // Predicated region
      $region21: #{tpu_custom_call.1} parent=11 // pred_check
        %p212 = pneg %p102
      $region22: #{tpu_custom_call.1} parent=11 // pred_check_branch
        %214 = sbr.rel (%p212) target = $region24
      $region23: #{tpu_custom_call.1} parent=11 // pred_region
        _
      $region24: #{tpu_custom_call.1} parent=11 // pred_fallthru
        _
      // Predicated region
      $region25: #{tpu_custom_call.1} parent=11 // pred_check
        %p215 = pneg %p123
      $region26: #{tpu_custom_call.1} parent=11 // pred_check_branch
        %217 = sbr.rel (%p215) target = $region28
      $region27: #{tpu_custom_call.1} parent=11 // pred_region
        _
      $region28: #{tpu_custom_call.1} parent=11 // pred_fallthru
        _
      // Predicated region
      $region29: #{tpu_custom_call.1} parent=11 // pred_check
        %p218 = pneg %p144
      $region30: #{tpu_custom_call.1} parent=11 // pred_check_branch
        %220 = sbr.rel (%p218) target = $region32
      $region31: #{tpu_custom_call.1} parent=11 // pred_region
        _
      $region32: #{tpu_custom_call.1} parent=11 // pred_fallthru
        _
      // Predicated region
      $region33: #{tpu_custom_call.1} parent=11 // pred_check
        %p221 = pneg %p165
      $region34: #{tpu_custom_call.1} parent=11 // pred_check_branch
        %223 = sbr.rel (%p221) target = $region36
      $region35: #{tpu_custom_call.1} parent=11 // pred_region
        _
      $region36: #{tpu_custom_call.1} parent=11 // pred_fallthru
        _
    $region12: #{tpu_custom_call.1} parent=5 // pred_fallthru
      _
    %p224 = scmp.lt.s32.totalorder %s13, 2
    // Predicated region
    $region37: #{tpu_custom_call.1} parent=5 // pred_check
      %p225 = pneg %p224
    $region38: #{tpu_custom_call.1} parent=5 // pred_check_branch
      %227 = sbr.rel (%p225) target = $region40
    $region39: #{tpu_custom_call.1} parent=5 // pred_region
      // Predicated region
      $region41: #{tpu_custom_call.1} parent=39 // pred_check
        %p228 = pneg %p33
      $region42: #{tpu_custom_call.1} parent=39 // pred_check_branch
        %230 = sbr.rel (%p228) target = $region44
      $region43: #{tpu_custom_call.1} parent=39 // pred_region
        %p231 = scmp.lt.s32.totalorder %s13, 1
        %s232 = scalar_select %p231, %s13, 1
        %s233 = smul.addr %s232, 8
        %s234 = smul.addr %s233, 4
        %s235 = scalar_lea.vmem %s0, %s234
      $region44: #{tpu_custom_call.1} parent=39 // pred_fallthru
        _
    $region40: #{tpu_custom_call.1} parent=5 // pred_fallthru
      _
    %p236 = scmp.le.s32.totalorder 1, %s13
    %p237 = scmp.lt.s32.totalorder %s13, 3
    %p238 = pnand %p236, %p237
    %p239 = pneg %p238
    // Predicated region
    $region45: #{tpu_custom_call.1} parent=5 // pred_check
      _
    $region46: #{tpu_custom_call.1} parent=5 // pred_check_branch
      %241 = sbr.rel (%p238) target = $region48
    $region47: #{tpu_custom_call.1} parent=5 // pred_region
      %s242 = ssub.s32 %s13, 1
      %p243 = scmp.lt.s32.totalorder %s18, 1
      %s244 = scalar_select %p243, %s18, 1
      %s245 = smul.addr %s244, 8
      %s246 = smul.addr %s245, 4
      %s247 = scalar_lea.vmem %s0, %s246
      %p248 = pneg %p39
      %p249 = pneg %p36
      %p250 = pneg %p60
      %p251 = pneg %p57
      %p252 = pneg %p81
      %p253 = pneg %p78
      %p254 = pneg %p102
      %p255 = pneg %p99
      %p256 = pneg %p123
      %p257 = pneg %p120
      %p258 = pneg %p144
      %p259 = pneg %p141
      %p260 = pneg %p165
      %p261 = pneg %p162
      %p262 = pneg %p191
      %p263 = pneg %p188
      %p264 = scmp.lt.s32.totalorder %s18, 1
      %s265 = scalar_select %p264, %s18, 1
      %s266 = smul.addr %s265, 8
      %s267 = smul.addr %s266, 4
      %s268 = scalar_lea.vmem %s7, %s267
      %p269 = scmp.lt.s32.totalorder %s18, 1
      %s270 = scalar_select %p269, %s18, 1
      %s271 = smul.addr %s270, 8
      %s272 = smul.addr %s271, 4
      %s273 = scalar_lea.vmem %s0, %s272
      %p274 = scmp.lt.s32.totalorder %s18, 1
      %s275 = scalar_select %p274, %s18, 1
      %s276 = smul.addr %s275, 8
      %s277 = smul.addr %s276, 4
      %s278 = scalar_lea.vmem %s7, %s277
      %v280 = vld [vmem:[%s273] sm:$0xf]
      %v281 = vld [vmem:[%s273 + $0x4] sm:$0xf]
      %v282 = vld [vmem:[%s273 + $0x8] sm:$0xf]
      %v283 = vld [vmem:[%s273 + $0xc] sm:$0xf]
      %v284 = vld [vmem:[%s273 + $0x10] sm:$0xf]
      %v285 = vld [vmem:[%s273 + $0x14] sm:$0xf]
      %v286 = vld [vmem:[%s273 + $0x18] sm:$0xf]
      %v287 = vld [vmem:[%s273 + $0x1c] sm:$0xf]
      %v288 = vld [vmem:[%s1] sm:$0xf]
      %v289 = vld [vmem:[%s1 + $0x4] sm:$0xf]
      %v290 = vld [vmem:[%s2] sm:$0x1]
      %v292 = vlaneseq
      %v293 = vshrl.u32 %v292, 7
      %v294 = vsub.s32 0, %v293
      %v295 = vrot.slane %v290, %v294
      %v305 = vunpack.c.l.b16 %v280
      %v306 = vunpack.c.l.b16 %v281
      %v307 = vunpack.c.l.b16 %v282
      %v308 = vunpack.c.l.b16 %v283
      %v309 = vunpack.c.l.b16 %v284
      %v310 = vunpack.c.l.b16 %v285
      %v311 = vunpack.c.l.b16 %v286
      %v312 = vunpack.c.l.b16 %v287
      %v313 = vpack.c.b16 %v306, %v305
      %v314 = vpack.c.b16 %v308, %v307
      %v315 = vpack.c.b16 %v310, %v309
      %v316 = vpack.c.b16 %v312, %v311
      %v319 = vunpack.c.l.b16 %v288
      %v320 = vunpack.c.l.b16 %v289
      %v321 = vpack.c.b16 %v320, %v319
      %vm323 = vcmask 130048
      %v325 = vsel %vm323, %v313, 0
      %v328 = vsel %vm323, %v314, 0
      %v331 = vsel %vm323, %v315, 0
      %v334 = vsel %vm323, %v316, 0
      %336 = vmatprep.subr.bf16.mxu0 0
      %337 = vmatpush1.bf16.msra.mxu0 %v321
      %338 = vmatprep.subr.bf16.mxu0 0
      %339 = vmatpush1.bf16.msra.mxu0 0
      %340 = vmatprep.subr.bf16.mxu0 0
      %341 = vmatpush1.bf16.msra.mxu0 0
      %342 = vmatprep.subr.bf16.mxu0 0
      %343 = vmatpush1.bf16.msra.mxu0 0
      %344 = vmatprep.subr.bf16.mxu0 0
      %345 = vmatpush1.bf16.msra.mxu0 0
      %346 = vmatprep.subr.bf16.mxu0 0
      %347 = vmatpush1.bf16.msra.mxu0 0
      %348 = vmatprep.subr.bf16.mxu0 0
      %349 = vmatpush1.bf16.msra.mxu0 0
      %350 = vmatprep.subr.bf16.mxu0 0
      %351 = vmatpush1.bf16.msra.mxu0 0
      %352 = vmatprep.subr.bf16.mxu0 0
      %353 = vmatpush1.bf16.msra.mxu0 0
      %354 = vmatprep.subr.bf16.mxu0 0
      %355 = vmatpush1.bf16.msra.mxu0 0
      %356 = vmatprep.subr.bf16.mxu0 0
      %357 = vmatpush1.bf16.msra.mxu0 0
      %358 = vmatprep.subr.bf16.mxu0 0
      %359 = vmatpush1.bf16.msra.mxu0 0
      %360 = vmatprep.subr.bf16.mxu0 0
      %361 = vmatpush1.bf16.msra.mxu0 0
      %362 = vmatprep.subr.bf16.mxu0 0
      %363 = vmatpush1.bf16.msra.mxu0 0
      %364 = vmatprep.subr.bf16.mxu0 0
      %365 = vmatpush1.bf16.msra.mxu0 0
      %366 = vmatprep.subr.bf16.mxu0 0
      %367 = vmatpush1.bf16.msra.mxu0 0
      %368 = vmatprep.mubr.bf16.mxu0 0
      %369 = vmatmul.mubr.bf16.gmra.mrb[0].mxu0 %v325
      %v370 = vpop.f32.mrb[0].mxu0
      %v371 = vadd.f32 %v295, %v370
      %v372 = vpop.f32.mrb[0].mxu0
      %v373 = vpop.f32.mrb[0].mxu0
      %v374 = vadd.f32 %v295, %v373
      %v375 = vpop.f32.mrb[0].mxu0
      %376 = vmatprep.mubr.bf16.mxu0 0
      %377 = vmatmul.mubr.bf16.gmra.mrb[0].mxu0 %v328
      %v378 = vpop.f32.mrb[0].mxu0
      %v379 = vadd.f32 %v295, %v378
      %v380 = vpop.f32.mrb[0].mxu0
      %v381 = vpop.f32.mrb[0].mxu0
      %v382 = vadd.f32 %v295, %v381
      %v383 = vpop.f32.mrb[0].mxu0
      %384 = vmatprep.mubr.bf16.mxu0 0
      %385 = vmatmul.mubr.bf16.gmra.mrb[0].mxu0 %v331
      %v386 = vpop.f32.mrb[0].mxu0
      %v387 = vadd.f32 %v295, %v386
      %v388 = vpop.f32.mrb[0].mxu0
      %v389 = vpop.f32.mrb[0].mxu0
      %v390 = vadd.f32 %v295, %v389
      %v391 = vpop.f32.mrb[0].mxu0
      %392 = vmatprep.mubr.bf16.mxu0 0
      %393 = vmatmul.mubr.bf16.gmra.mrb[0].mxu0 %v334
      %v394 = vpop.f32.mrb[0].mxu0
      %v395 = vadd.f32 %v295, %v394
      %v396 = vpop.f32.mrb[0].mxu0
      %v397 = vpop.f32.mrb[0].mxu0
      %v398 = vadd.f32 %v295, %v397
      %v399 = vpop.f32.mrb[0].mxu0
      %400 = vdwg.mxu0
      %v401 = vmax.f32 %v371, 0.0
      %v402 = vmax.f32 %v374, 0.0
      %v403 = vmax.f32 %v379, 0.0
      %v404 = vmax.f32 %v382, 0.0
      %v405 = vmax.f32 %v387, 0.0
      %v406 = vmax.f32 %v390, 0.0
      %v407 = vmax.f32 %v395, 0.0
      %v408 = vmax.f32 %v398, 0.0
      %v409 = vpack.c.bf16 %v402, %v401
      %v410 = vpack.c.bf16 %v404, %v403
      %v411 = vpack.c.bf16 %v406, %v405
      %v412 = vpack.c.bf16 %v408, %v407
      %vm413 = vcmask 27648
      %414 = vst.msk [vmem:[#allocation2] sm:$0xf] %vm413, 0
      %vm415 = vcmask 24576
      %416 = vst.msk [vmem:[#allocation2 + $0x4] sm:$0x1] %vm415, 0
      %s417 = scalar_lea.vmem [#allocation2], 72
      %418 = vst.msk [vmem:[%s417] sm:$0xf] %vm413, 0
      %419 = vst.msk [vmem:[%s417 + $0x4] sm:$0x1] %vm415, 0
      %vm420 = vcmask 24576
      %vm421 = vsmask.f32 256
      %vm422 = vmand %vm420, %vm421
      %v423 = vld [vmem:[#allocation2] sm:$0x1]
      %v424 = vsel %vm422, 0, %v423
      %425 = vst [vmem:[#allocation2] sm:$0x1] %v424
      %v426 = vld [vmem:[#allocation2 + $0x8] sm:$0x1]
      %v427 = vsel %vm422, 0, %v426
      %428 = vst [vmem:[#allocation2 + $0x8] sm:$0x1] %v427
      %v429 = vld [vmem:[#allocation2 + $0x10] sm:$0x1]
      %v430 = vsel %vm422, 0, %v429
      %431 = vst [vmem:[#allocation2 + $0x10] sm:$0x1] %v430
      %v432 = vld [vmem:[#allocation2 + $0x18] sm:$0x1]
      %v433 = vsel %vm422, 0, %v432
      %434 = vst [vmem:[#allocation2 + $0x18] sm:$0x1] %v433
      %v435 = vld [vmem:[#allocation2 + $0x20] sm:$0x1]
      %v436 = vsel %vm422, 0, %v435
      %437 = vst [vmem:[#allocation2 + $0x20] sm:$0x1] %v436
      %v438 = vld [vmem:[#allocation2 + $0x28] sm:$0x1]
      %v439 = vsel %vm422, 0, %v438
      %440 = vst [vmem:[#allocation2 + $0x28] sm:$0x1] %v439
      %v441 = vld [vmem:[#allocation2 + $0x30] sm:$0x1]
      %v442 = vsel %vm422, 0, %v441
      %443 = vst [vmem:[#allocation2 + $0x30] sm:$0x1] %v442
      %v444 = vld [vmem:[#allocation2 + $0x38] sm:$0x1]
      %v445 = vsel %vm422, 0, %v444
      %446 = vst [vmem:[#allocation2 + $0x38] sm:$0x1] %v445
      %v447 = vld [vmem:[#allocation2 + $0x40] sm:$0x1]
      %v448 = vsel %vm422, 0, %v447
      %449 = vst [vmem:[#allocation2 + $0x40] sm:$0x1] %v448
      %v450 = vld [vmem:[#allocation2 + $0x48] sm:$0x1]
      %v451 = vsel %vm422, 0, %v450
      %452 = vst [vmem:[#allocation2 + $0x48] sm:$0x1] %v451
      %vm453 = vsmask.f32 7938
      %vm454 = vmand %vm420, %vm453
      %v455 = vld [vmem:[#allocation2 + $0x4] sm:$0x1]
      %v456 = vsel %vm454, 0, %v455
      %457 = vst [vmem:[#allocation2 + $0x4] sm:$0x1] %v456
      %v458 = vld [vmem:[#allocation2 + $0xc] sm:$0x1]
      %v459 = vsel %vm454, 0, %v458
      %460 = vst [vmem:[#allocation2 + $0xc] sm:$0x1] %v459
      %v461 = vld [vmem:[#allocation2 + $0x14] sm:$0x1]
      %v462 = vsel %vm454, 0, %v461
      %463 = vst [vmem:[#allocation2 + $0x14] sm:$0x1] %v462
      %v464 = vld [vmem:[#allocation2 + $0x1c] sm:$0x1]
      %v465 = vsel %vm454, 0, %v464
      %466 = vst [vmem:[#allocation2 + $0x1c] sm:$0x1] %v465
      %v467 = vld [vmem:[#allocation2 + $0x24] sm:$0x1]
      %v468 = vsel %vm454, 0, %v467
      %469 = vst [vmem:[#allocation2 + $0x24] sm:$0x1] %v468
      %v470 = vld [vmem:[#allocation2 + $0x2c] sm:$0x1]
      %v471 = vsel %vm454, 0, %v470
      %472 = vst [vmem:[#allocation2 + $0x2c] sm:$0x1] %v471
      %v473 = vld [vmem:[#allocation2 + $0x34] sm:$0x1]
      %v474 = vsel %vm454, 0, %v473
      %475 = vst [vmem:[#allocation2 + $0x34] sm:$0x1] %v474
      %v476 = vld [vmem:[#allocation2 + $0x3c] sm:$0x1]
      %v477 = vsel %vm454, 0, %v476
      %478 = vst [vmem:[#allocation2 + $0x3c] sm:$0x1] %v477
      %v479 = vld [vmem:[#allocation2 + $0x44] sm:$0x1]
      %v480 = vsel %vm454, 0, %v479
      %481 = vst [vmem:[#allocation2 + $0x44] sm:$0x1] %v480
      %v482 = vld [vmem:[#allocation2 + $0x4c] sm:$0x1]
      %v483 = vsel %vm454, 0, %v482
      %484 = vst [vmem:[#allocation2 + $0x4c] sm:$0x1] %v483
      %v489 = vunpack.c.l.b16 %v409
      %v490 = vunpack.c.h.b16 %v409
      %v491 = vunpack.c.l.b16 %v410
      %v492 = vunpack.c.h.b16 %v410
      %v493 = vunpack.c.l.b16 %v411
      %v494 = vunpack.c.h.b16 %v411
      %v495 = vunpack.c.l.b16 %v412
      %v496 = vunpack.c.h.b16 %v412
      %v497 = vpack.c.b16 %v489, %v489
      %v498 = vpack.c.b16 %v490, %v490
      %v499 = vpack.c.b16 %v491, %v491
      %v500 = vpack.c.b16 %v492, %v492
      %v501 = vpack.c.b16 %v493, %v493
      %v502 = vpack.c.b16 %v494, %v494
      %v503 = vpack.c.b16 %v495, %v495
      %v504 = vpack.c.b16 %v496, %v496
      %v506 = vshrl.u32 %v497, 16
      %v508 = vrot.slane %v506, 7
      %v509 = vshll.u32 %v497, 16
      %v511 = vor.u32 %v508, %v509
      %v512 = vrot.slane %v508, 4
      %v514 = vshrl.u32 %v498, 16
      %v516 = vrot.slane %v514, 7
      %v517 = vshll.u32 %v498, 16
      %v519 = vor.u32 %v516, %v517
      %v520 = vrot.slane %v516, 4
      %v522 = vshrl.u32 %v499, 16
      %v524 = vrot.slane %v522, 7
      %v525 = vshll.u32 %v499, 16
      %v527 = vor.u32 %v524, %v525
      %v528 = vrot.slane %v524, 4
      %v530 = vshrl.u32 %v500, 16
      %v532 = vrot.slane %v530, 7
      %v533 = vshll.u32 %v500, 16
      %v535 = vor.u32 %v532, %v533
      %v536 = vrot.slane %v532, 4
      %v538 = vshrl.u32 %v501, 16
      %v540 = vrot.slane %v538, 7
      %v541 = vshll.u32 %v501, 16
      %v543 = vor.u32 %v540, %v541
      %v544 = vrot.slane %v540, 4
      %v546 = vshrl.u32 %v502, 16
      %v548 = vrot.slane %v546, 7
      %v549 = vshll.u32 %v502, 16
      %v551 = vor.u32 %v548, %v549
      %v552 = vrot.slane %v548, 4
      %v554 = vshrl.u32 %v503, 16
      %v556 = vrot.slane %v554, 7
      %v557 = vshll.u32 %v503, 16
      %v559 = vor.u32 %v556, %v557
      %v560 = vrot.slane %v556, 4
      %v562 = vshrl.u32 %v504, 16
      %v564 = vrot.slane %v562, 7
      %v565 = vshll.u32 %v504, 16
      %v567 = vor.u32 %v564, %v565
      %v568 = vrot.slane %v564, 4
      %s585 = scalar_lea.vmem [#allocation2], 8
      %vm586 = vcmask 27648
      %vm587 = vmand %vm586, %vm453
      %v588 = vld [vmem:[%s585] sm:$0xf]
      %v589 = vsel %vm587, %v511, %v588
      %590 = vst [vmem:[%s585] sm:$0xf] %v589
      %v591 = vld [vmem:[%s585 + $0x4] sm:$0x1]
      %v592 = vsel %vm422, %v512, %v591
      %593 = vst [vmem:[%s585 + $0x4] sm:$0x1] %v592
      %v594 = vld [vmem:[%s585 + $0x8] sm:$0xf]
      %v595 = vsel %vm587, %v519, %v594
      %596 = vst [vmem:[%s585 + $0x8] sm:$0xf] %v595
      %v597 = vld [vmem:[%s585 + $0xc] sm:$0x1]
      %v598 = vsel %vm422, %v520, %v597
      %599 = vst [vmem:[%s585 + $0xc] sm:$0x1] %v598
      %v600 = vld [vmem:[%s585 + $0x10] sm:$0xf]
      %v601 = vsel %vm587, %v527, %v600
      %602 = vst [vmem:[%s585 + $0x10] sm:$0xf] %v601
      %v603 = vld [vmem:[%s585 + $0x14] sm:$0x1]
      %v604 = vsel %vm422, %v528, %v603
      %605 = vst [vmem:[%s585 + $0x14] sm:$0x1] %v604
      %v606 = vld [vmem:[%s585 + $0x18] sm:$0xf]
      %v607 = vsel %vm587, %v535, %v606
      %608 = vst [vmem:[%s585 + $0x18] sm:$0xf] %v607
      %v609 = vld [vmem:[%s585 + $0x1c] sm:$0x1]
      %v610 = vsel %vm422, %v536, %v609
      %611 = vst [vmem:[%s585 + $0x1c] sm:$0x1] %v610
      %v612 = vld [vmem:[%s585 + $0x20] sm:$0xf]
      %v613 = vsel %vm587, %v543, %v612
      %614 = vst [vmem:[%s585 + $0x20] sm:$0xf] %v613
      %v615 = vld [vmem:[%s585 + $0x24] sm:$0x1]
      %v616 = vsel %vm422, %v544, %v615
      %617 = vst [vmem:[%s585 + $0x24] sm:$0x1] %v616
      %v618 = vld [vmem:[%s585 + $0x28] sm:$0xf]
      %v619 = vsel %vm587, %v551, %v618
      %620 = vst [vmem:[%s585 + $0x28] sm:$0xf] %v619
      %v621 = vld [vmem:[%s585 + $0x2c] sm:$0x1]
      %v622 = vsel %vm422, %v552, %v621
      %623 = vst [vmem:[%s585 + $0x2c] sm:$0x1] %v622
      %v624 = vld [vmem:[%s585 + $0x30] sm:$0xf]
      %v625 = vsel %vm587, %v559, %v624
      %626 = vst [vmem:[%s585 + $0x30] sm:$0xf] %v625
      %v627 = vld [vmem:[%s585 + $0x34] sm:$0x1]
      %v628 = vsel %vm422, %v560, %v627
      %629 = vst [vmem:[%s585 + $0x34] sm:$0x1] %v628
      %v630 = vld [vmem:[%s585 + $0x38] sm:$0xf]
      %v631 = vsel %vm587, %v567, %v630
      %632 = vst [vmem:[%s585 + $0x38] sm:$0xf] %v631
      %v633 = vld [vmem:[%s585 + $0x3c] sm:$0x1]
      %v634 = vsel %vm422, %v568, %v633
      %635 = vst [vmem:[%s585 + $0x3c] sm:$0x1] %v634
      %v636 = vld [vmem:[#allocation2] sm:$0xf]
      %v637 = vld [vmem:[#allocation2 + $0x8] sm:$0xf]
      %v638 = vld [vmem:[#allocation2 + $0x10] sm:$0xf]
      %v639 = vld [vmem:[#allocation2 + $0x18] sm:$0xf]
      %v640 = vld [vmem:[#allocation2 + $0x20] sm:$0xf]
      %v641 = vld [vmem:[#allocation2 + $0x28] sm:$0xf]
      %v642 = vld [vmem:[#allocation2 + $0x30] sm:$0xf]
      %v643 = vld [vmem:[#allocation2 + $0x38] sm:$0xf]
      %v644 = vld [vmem:[%s3] sm:$0x3]
      %v645 = vld [vmem:[#allocation2 + $0x4] sm:$0x1]
      %v646 = vld [vmem:[#allocation2 + $0xc] sm:$0x1]
      %v647 = vld [vmem:[#allocation2 + $0x14] sm:$0x1]
      %v648 = vld [vmem:[#allocation2 + $0x1c] sm:$0x1]
      %v649 = vld [vmem:[#allocation2 + $0x24] sm:$0x1]
      %v650 = vld [vmem:[#allocation2 + $0x2c] sm:$0x1]
      %v651 = vld [vmem:[#allocation2 + $0x34] sm:$0x1]
      %v652 = vld [vmem:[#allocation2 + $0x3c] sm:$0x1]
      %vm653 = vsmask.f32 3328
      %vm654 = vsmask.f32 7440
      %vm655 = vmor %vm653, %vm654
      %v657 = vshrl.u32 %v636, 16
      %v659 = vrot.slane %v657, 4
      %v660 = vshll.u32 %v636, 16
      %v662 = vrot.slane %v660, 5
      %v663 = vor.u32 %v659, %v662
      %v664 = vrot.slane %v663, 4
      %v666 = vshll.u32 %v645, 16
      %v668 = vrot.slane %v666, 5
      %v669 = vsel %vm655, %v664, %v668
      %v671 = vshrl.u32 %v637, 16
      %v673 = vrot.slane %v671, 4
      %v674 = vshll.u32 %v637, 16
      %v676 = vrot.slane %v674, 5
      %v677 = vor.u32 %v673, %v676
      %v678 = vrot.slane %v677, 4
      %v680 = vshll.u32 %v646, 16
      %v682 = vrot.slane %v680, 5
      %v683 = vsel %vm655, %v678, %v682
      %v685 = vshrl.u32 %v638, 16
      %v687 = vrot.slane %v685, 4
      %v688 = vshll.u32 %v638, 16
      %v690 = vrot.slane %v688, 5
      %v691 = vor.u32 %v687, %v690
      %v692 = vrot.slane %v691, 4
      %v694 = vshll.u32 %v647, 16
      %v696 = vrot.slane %v694, 5
      %v697 = vsel %vm655, %v692, %v696
      %v699 = vshrl.u32 %v639, 16
      %v701 = vrot.slane %v699, 4
      %v702 = vshll.u32 %v639, 16
      %v704 = vrot.slane %v702, 5
      %v705 = vor.u32 %v701, %v704
      %v706 = vrot.slane %v705, 4
      %v708 = vshll.u32 %v648, 16
      %v710 = vrot.slane %v708, 5
      %v711 = vsel %vm655, %v706, %v710
      %v713 = vshrl.u32 %v640, 16
      %v715 = vrot.slane %v713, 4
      %v716 = vshll.u32 %v640, 16
      %v718 = vrot.slane %v716, 5
      %v719 = vor.u32 %v715, %v718
      %v720 = vrot.slane %v719, 4
      %v722 = vshll.u32 %v649, 16
      %v724 = vrot.slane %v722, 5
      %v725 = vsel %vm655, %v720, %v724
      %v727 = vshrl.u32 %v641, 16
      %v729 = vrot.slane %v727, 4
      %v730 = vshll.u32 %v641, 16
      %v732 = vrot.slane %v730, 5
      %v733 = vor.u32 %v729, %v732
      %v734 = vrot.slane %v733, 4
      %v736 = vshll.u32 %v650, 16
      %v738 = vrot.slane %v736, 5
      %v739 = vsel %vm655, %v734, %v738
      %v741 = vshrl.u32 %v642, 16
      %v743 = vrot.slane %v741, 4
      %v744 = vshll.u32 %v642, 16
      %v746 = vrot.slane %v744, 5
      %v747 = vor.u32 %v743, %v746
      %v748 = vrot.slane %v747, 4
      %v750 = vshll.u32 %v651, 16
      %v752 = vrot.slane %v750, 5
      %v753 = vsel %vm655, %v748, %v752
      %v755 = vshrl.u32 %v643, 16
      %v757 = vrot.slane %v755, 4
      %v758 = vshll.u32 %v643, 16
      %v760 = vrot.slane %v758, 5
      %v761 = vor.u32 %v757, %v760
      %v762 = vrot.slane %v761, 4
      %v764 = vshll.u32 %v652, 16
      %v766 = vrot.slane %v764, 5
      %v767 = vsel %vm655, %v762, %v766
      %v768 = vld [vmem:[%s3] sm:$0xc]
      %v769 = vunpack.c.l.b16 %v669
      %v770 = vunpack.c.l.b16 %v683
      %v771 = vunpack.c.l.b16 %v697
      %v772 = vunpack.c.l.b16 %v711
      %v773 = vunpack.c.l.b16 %v725
      %v774 = vunpack.c.l.b16 %v739
      %v775 = vunpack.c.l.b16 %v753
      %v776 = vunpack.c.l.b16 %v767
      %v777 = vpack.c.b16 %v770, %v769
      %v778 = vpack.c.b16 %v772, %v771
      %v779 = vpack.c.b16 %v774, %v773
      %v780 = vpack.c.b16 %v776, %v775
      %v782 = vunpack.c.l.b16 %v768
      %v783 = vpack.c.b16 %v782, %v782
      %v784 = vrot.slane %v783, 2
      %vm785 = vcmask 31744
      %v787 = vsel %vm785, %v777, 0
      %v790 = vsel %vm785, %v778, 0
      %v793 = vsel %vm785, %v779, 0
      %v796 = vsel %vm785, %v780, 0
      %vm798 = vcmask 1041408
      %v800 = vsel %vm798, %v784, 0
      %802 = vmatprep.subr.bf16.mxu0 0
      %803 = vmatpush1.bf16.msra.mxu0 %v800
      %804 = vmatprep.subr.bf16.mxu0 0
      %805 = vmatpush1.bf16.msra.mxu0 0
      %806 = vmatprep.subr.bf16.mxu0 0
      %807 = vmatpush1.bf16.msra.mxu0 0
      %808 = vmatprep.subr.bf16.mxu0 0
      %809 = vmatpush1.bf16.msra.mxu0 0
      %810 = vmatprep.subr.bf16.mxu0 0
      %811 = vmatpush1.bf16.msra.mxu0 0
      %812 = vmatprep.subr.bf16.mxu0 0
      %813 = vmatpush1.bf16.msra.mxu0 0
      %814 = vmatprep.subr.bf16.mxu0 0
      %815 = vmatpush1.bf16.msra.mxu0 0
      %816 = vmatprep.subr.bf16.mxu0 0
      %817 = vmatpush1.bf16.msra.mxu0 0
      %818 = vmatprep.subr.bf16.mxu0 0
      %819 = vmatpush1.bf16.msra.mxu0 0
      %820 = vmatprep.subr.bf16.mxu0 0
      %821 = vmatpush1.bf16.msra.mxu0 0
      %822 = vmatprep.subr.bf16.mxu0 0
      %823 = vmatpush1.bf16.msra.mxu0 0
      %824 = vmatprep.subr.bf16.mxu0 0
      %825 = vmatpush1.bf16.msra.mxu0 0
      %826 = vmatprep.subr.bf16.mxu0 0
      %827 = vmatpush1.bf16.msra.mxu0 0
      %828 = vmatprep.subr.bf16.mxu0 0
      %829 = vmatpush1.bf16.msra.mxu0 0
      %830 = vmatprep.subr.bf16.mxu0 0
      %831 = vmatpush1.bf16.msra.mxu0 0
      %832 = vmatprep.subr.bf16.mxu0 0
      %833 = vmatpush1.bf16.msra.mxu0 0
      %834 = vmatprep.mubr.bf16.mxu0 0
      %835 = vmatmul.mubr.bf16.gmra.mrb[0].mxu0 %v787
      %v836 = vpop.f32.mrb[0].mxu0
      %v837 = vadd.f32 0.0, %v836
      %v838 = vpop.f32.mrb[0].mxu0
      %v839 = vpop.f32.mrb[0].mxu0
      %v840 = vadd.f32 0.0, %v839
      %v841 = vpop.f32.mrb[0].mxu0
      %842 = vmatprep.mubr.bf16.mxu0 0
      %843 = vmatmul.mubr.bf16.gmra.mrb[0].mxu0 %v790
      %v844 = vpop.f32.mrb[0].mxu0
      %v845 = vadd.f32 0.0, %v844
      %v846 = vpop.f32.mrb[0].mxu0
      %v847 = vpop.f32.mrb[0].mxu0
      %v848 = vadd.f32 0.0, %v847
      %v849 = vpop.f32.mrb[0].mxu0
      %850 = vmatprep.mubr.bf16.mxu0 0
      %851 = vmatmul.mubr.bf16.gmra.mrb[0].mxu0 %v793
      %v852 = vpop.f32.mrb[0].mxu0
      %v853 = vadd.f32 0.0, %v852
      %v854 = vpop.f32.mrb[0].mxu0
      %v855 = vpop.f32.mrb[0].mxu0
      %v856 = vadd.f32 0.0, %v855
      %v857 = vpop.f32.mrb[0].mxu0
      %858 = vmatprep.mubr.bf16.mxu0 0
      %859 = vmatmul.mubr.bf16.gmra.mrb[0].mxu0 %v796
      %v860 = vpop.f32.mrb[0].mxu0
      %v861 = vadd.f32 0.0, %v860
      %v862 = vpop.f32.mrb[0].mxu0
      %v863 = vpop.f32.mrb[0].mxu0
      %v864 = vadd.f32 0.0, %v863
      %v865 = vpop.f32.mrb[0].mxu0
      %866 = vdwg.mxu0
      %v875 = vunpack.c.l.b16 %v636
      %v876 = vunpack.c.l.b16 %v637
      %v877 = vunpack.c.l.b16 %v638
      %v878 = vunpack.c.l.b16 %v639
      %v879 = vunpack.c.l.b16 %v640
      %v880 = vunpack.c.l.b16 %v641
      %v881 = vunpack.c.l.b16 %v642
      %v882 = vunpack.c.l.b16 %v643
      %v883 = vpack.c.b16 %v876, %v875
      %v884 = vpack.c.b16 %v878, %v877
      %v885 = vpack.c.b16 %v880, %v879
      %v886 = vpack.c.b16 %v882, %v881
      %v888 = vsel %vm785, %v883, 0
      %v891 = vsel %vm785, %v884, 0
      %v894 = vsel %vm785, %v885, 0
      %v897 = vsel %vm785, %v886, 0
      %v900 = vsel %vm798, %v644, 0
      %902 = vmatprep.subr.bf16.mxu0 0
      %903 = vmatpush1.bf16.msra.mxu0 %v900
      %904 = vmatprep.subr.bf16.mxu0 0
      %905 = vmatpush1.bf16.msra.mxu0 0
      %906 = vmatprep.subr.bf16.mxu0 0
      %907 = vmatpush1.bf16.msra.mxu0 0
      %908 = vmatprep.subr.bf16.mxu0 0
      %909 = vmatpush1.bf16.msra.mxu0 0
      %910 = vmatprep.subr.bf16.mxu0 0
      %911 = vmatpush1.bf16.msra.mxu0 0
      %912 = vmatprep.subr.bf16.mxu0 0
      %913 = vmatpush1.bf16.msra.mxu0 0
      %914 = vmatprep.subr.bf16.mxu0 0
      %915 = vmatpush1.bf16.msra.mxu0 0
      %916 = vmatprep.subr.bf16.mxu0 0
      %917 = vmatpush1.bf16.msra.mxu0 0
      %918 = vmatprep.subr.bf16.mxu0 0
      %919 = vmatpush1.bf16.msra.mxu0 0
      %920 = vmatprep.subr.bf16.mxu0 0
      %921 = vmatpush1.bf16.msra.mxu0 0
      %922 = vmatprep.subr.bf16.mxu0 0
      %923 = vmatpush1.bf16.msra.mxu0 0
      %924 = vmatprep.subr.bf16.mxu0 0
      %925 = vmatpush1.bf16.msra.mxu0 0
      %926 = vmatprep.subr.bf16.mxu0 0
      %927 = vmatpush1.bf16.msra.mxu0 0
      %928 = vmatprep.subr.bf16.mxu0 0
      %929 = vmatpush1.bf16.msra.mxu0 0
      %930 = vmatprep.subr.bf16.mxu0 0
      %931 = vmatpush1.bf16.msra.mxu0 0
      %932 = vmatprep.subr.bf16.mxu0 0
      %933 = vmatpush1.bf16.msra.mxu0 0
      %934 = vmatprep.mubr.bf16.mxu0 0
      %935 = vmatmul.mubr.bf16.gmra.mrb[0].mxu0 %v888
      %v936 = vpop.f32.mrb[0].mxu0
      %v937 = vadd.f32 %v837, %v936
      %v938 = vpop.f32.mrb[0].mxu0
      %v939 = vpop.f32.mrb[0].mxu0
      %v940 = vadd.f32 %v840, %v939
      %v941 = vpop.f32.mrb[0].mxu0
      %942 = vmatprep.mubr.bf16.mxu0 0
      %943 = vmatmul.mubr.bf16.gmra.mrb[0].mxu0 %v891
      %v944 = vpop.f32.mrb[0].mxu0
      %v945 = vadd.f32 %v845, %v944
      %v946 = vpop.f32.mrb[0].mxu0
      %v947 = vpop.f32.mrb[0].mxu0
      %v948 = vadd.f32 %v848, %v947
      %v949 = vpop.f32.mrb[0].mxu0
      %950 = vmatprep.mubr.bf16.mxu0 0
      %951 = vmatmul.mubr.bf16.gmra.mrb[0].mxu0 %v894
      %v952 = vpop.f32.mrb[0].mxu0
      %v953 = vadd.f32 %v853, %v952
      %v954 = vpop.f32.mrb[0].mxu0
      %v955 = vpop.f32.mrb[0].mxu0
      %v956 = vadd.f32 %v856, %v955
      %v957 = vpop.f32.mrb[0].mxu0
      %958 = vmatprep.mubr.bf16.mxu0 0
      %959 = vmatmul.mubr.bf16.gmra.mrb[0].mxu0 %v897
      %v960 = vpop.f32.mrb[0].mxu0
      %v961 = vadd.f32 %v861, %v960
      %v962 = vpop.f32.mrb[0].mxu0
      %v963 = vpop.f32.mrb[0].mxu0
      %v964 = vadd.f32 %v864, %v963
      %v965 = vpop.f32.mrb[0].mxu0
      %966 = vdwg.mxu0
      %v967 = vld [vmem:[#allocation2] sm:$0xe]
      %v968 = vld [vmem:[#allocation2 + $0x8] sm:$0xe]
      %v969 = vld [vmem:[#allocation2 + $0x10] sm:$0xe]
      %v970 = vld [vmem:[#allocation2 + $0x18] sm:$0xe]
      %v971 = vld [vmem:[#allocation2 + $0x20] sm:$0xe]
      %v972 = vld [vmem:[#allocation2 + $0x28] sm:$0xe]
      %v973 = vld [vmem:[#allocation2 + $0x30] sm:$0xe]
      %v974 = vld [vmem:[#allocation2 + $0x38] sm:$0xe]
      %vm991 = vcmask 1042432
      %vm992 = vcmask 1046532
      %vm993 = vmor %vm991, %vm992
      %v994 = vrot.slane %v967, 5
      %v995 = vrot.slane %v994, 4
      %v996 = vrot.slane %v645, 5
      %v997 = vsel %vm993, %v995, %v996
      %v998 = vrot.slane %v968, 5
      %v999 = vrot.slane %v998, 4
      %v1000 = vrot.slane %v646, 5
      %v1001 = vsel %vm993, %v999, %v1000
      %v1002 = vrot.slane %v969, 5
      %v1003 = vrot.slane %v1002, 4
      %v1004 = vrot.slane %v647, 5
      %v1005 = vsel %vm993, %v1003, %v1004
      %v1006 = vrot.slane %v970, 5
      %v1007 = vrot.slane %v1006, 4
      %v1008 = vrot.slane %v648, 5
      %v1009 = vsel %vm993, %v1007, %v1008
      %v1010 = vrot.slane %v971, 5
      %v1011 = vrot.slane %v1010, 4
      %v1012 = vrot.slane %v649, 5
      %v1013 = vsel %vm993, %v1011, %v1012
      %v1014 = vrot.slane %v972, 5
      %v1015 = vrot.slane %v1014, 4
      %v1016 = vrot.slane %v650, 5
      %v1017 = vsel %vm993, %v1015, %v1016
      %v1018 = vrot.slane %v973, 5
      %v1019 = vrot.slane %v1018, 4
      %v1020 = vrot.slane %v651, 5
      %v1021 = vsel %vm993, %v1019, %v1020
      %v1022 = vrot.slane %v974, 5
      %v1023 = vrot.slane %v1022, 4
      %v1024 = vrot.slane %v652, 5
      %v1025 = vsel %vm993, %v1023, %v1024
      %v1026 = vld [vmem:[%s3 + $0x4] sm:$0x3]
      %v1027 = vunpack.c.l.b16 %v997
      %v1028 = vunpack.c.l.b16 %v1001
      %v1029 = vunpack.c.l.b16 %v1005
      %v1030 = vunpack.c.l.b16 %v1009
      %v1031 = vunpack.c.l.b16 %v1013
      %v1032 = vunpack.c.l.b16 %v1017
      %v1033 = vunpack.c.l.b16 %v1021
      %v1034 = vunpack.c.l.b16 %v1025
      %v1035 = vpack.c.b16 %v1028, %v1027
      %v1036 = vpack.c.b16 %v1030, %v1029
      %v1037 = vpack.c.b16 %v1032, %v1031
      %v1038 = vpack.c.b16 %v1034, %v1033
      %v1040 = vsel %vm785, %v1035, 0
      %v1043 = vsel %vm785, %v1036, 0
      %v1046 = vsel %vm785, %v1037, 0
      %v1049 = vsel %vm785, %v1038, 0
      %v1052 = vsel %vm798, %v1026, 0
      %1054 = vmatprep.subr.bf16.mxu0 0
      %1055 = vmatpush1.bf16.msra.mxu0 %v1052
      %1056 = vmatprep.subr.bf16.mxu0 0
      %1057 = vmatpush1.bf16.msra.mxu0 0
      %1058 = vmatprep.subr.bf16.mxu0 0
      %1059 = vmatpush1.bf16.msra.mxu0 0
      %1060 = vmatprep.subr.bf16.mxu0 0
      %1061 = vmatpush1.bf16.msra.mxu0 0
      %1062 = vmatprep.subr.bf16.mxu0 0
      %1063 = vmatpush1.bf16.msra.mxu0 0
      %1064 = vmatprep.subr.bf16.mxu0 0
      %1065 = vmatpush1.bf16.msra.mxu0 0
      %1066 = vmatprep.subr.bf16.mxu0 0
      %1067 = vmatpush1.bf16.msra.mxu0 0
      %1068 = vmatprep.subr.bf16.mxu0 0
      %1069 = vmatpush1.bf16.msra.mxu0 0
      %1070 = vmatprep.subr.bf16.mxu0 0
      %1071 = vmatpush1.bf16.msra.mxu0 0
      %1072 = vmatprep.subr.bf16.mxu0 0
      %1073 = vmatpush1.bf16.msra.mxu0 0
      %1074 = vmatprep.subr.bf16.mxu0 0
      %1075 = vmatpush1.bf16.msra.mxu0 0
      %1076 = vmatprep.subr.bf16.mxu0 0
      %1077 = vmatpush1.bf16.msra.mxu0 0
      %1078 = vmatprep.subr.bf16.mxu0 0
      %1079 = vmatpush1.bf16.msra.mxu0 0
      %1080 = vmatprep.subr.bf16.mxu0 0
      %1081 = vmatpush1.bf16.msra.mxu0 0
      %1082 = vmatprep.subr.bf16.mxu0 0
      %1083 = vmatpush1.bf16.msra.mxu0 0
      %1084 = vmatprep.subr.bf16.mxu0 0
      %1085 = vmatpush1.bf16.msra.mxu0 0
      %1086 = vmatprep.mubr.bf16.mxu0 0
      %1087 = vmatmul.mubr.bf16.gmra.mrb[0].mxu0 %v1040
      %v1088 = vpop.f32.mrb[0].mxu0
      %v1089 = vadd.f32 0.0, %v1088
      %v1090 = vpop.f32.mrb[0].mxu0
      %v1091 = vpop.f32.mrb[0].mxu0
      %v1092 = vadd.f32 0.0, %v1091
      %v1093 = vpop.f32.mrb[0].mxu0
      %1094 = vmatprep.mubr.bf16.mxu0 0
      %1095 = vmatmul.mubr.bf16.gmra.mrb[0].mxu0 %v1043
      %v1096 = vpop.f32.mrb[0].mxu0
      %v1097 = vadd.f32 0.0, %v1096
      %v1098 = vpop.f32.mrb[0].mxu0
      %v1099 = vpop.f32.mrb[0].mxu0
      %v1100 = vadd.f32 0.0, %v1099
      %v1101 = vpop.f32.mrb[0].mxu0
      %1102 = vmatprep.mubr.bf16.mxu0 0
      %1103 = vmatmul.mubr.bf16.gmra.mrb[0].mxu0 %v1046
      %v1104 = vpop.f32.mrb[0].mxu0
      %v1105 = vadd.f32 0.0, %v1104
      %v1106 = vpop.f32.mrb[0].mxu0
      %v1107 = vpop.f32.mrb[0].mxu0
      %v1108 = vadd.f32 0.0, %v1107
      %v1109 = vpop.f32.mrb[0].mxu0
      %1110 = vmatprep.mubr.bf16.mxu0 0
      %1111 = vmatmul.mubr.bf16.gmra.mrb[0].mxu0 %v1049
      %v1112 = vpop.f32.mrb[0].mxu0
      %v1113 = vadd.f32 0.0, %v1112
      %v1114 = vpop.f32.mrb[0].mxu0
      %v1115 = vpop.f32.mrb[0].mxu0
      %v1116 = vadd.f32 0.0, %v1115
      %v1117 = vpop.f32.mrb[0].mxu0
      %1118 = vdwg.mxu0
      %v1119 = vadd.f32 %v937, %v1089
      %v1120 = vadd.f32 %v940, %v1092
      %v1121 = vadd.f32 %v945, %v1097
      %v1122 = vadd.f32 %v948, %v1100
      %v1123 = vadd.f32 %v953, %v1105
      %v1124 = vadd.f32 %v956, %v1108
      %v1125 = vadd.f32 %v961, %v1113
      %v1126 = vadd.f32 %v964, %v1116
      %v1127 = vld [vmem:[%s585] sm:$0xf]
      %v1128 = vld [vmem:[%s585 + $0x8] sm:$0xf]
      %v1129 = vld [vmem:[%s585 + $0x10] sm:$0xf]
      %v1130 = vld [vmem:[%s585 + $0x18] sm:$0xf]
      %v1131 = vld [vmem:[%s585 + $0x20] sm:$0xf]
      %v1132 = vld [vmem:[%s585 + $0x28] sm:$0xf]
      %v1133 = vld [vmem:[%s585 + $0x30] sm:$0xf]
      %v1134 = vld [vmem:[%s585 + $0x38] sm:$0xf]
      %v1135 = vld [vmem:[%s3 + $0x4] sm:$0xc]
      %v1144 = vunpack.c.l.b16 %v1127
      %v1145 = vunpack.c.l.b16 %v1128
      %v1146 = vunpack.c.l.b16 %v1129
      %v1147 = vunpack.c.l.b16 %v1130
      %v1148 = vunpack.c.l.b16 %v1131
      %v1149 = vunpack.c.l.b16 %v1132
      %v1150 = vunpack.c.l.b16 %v1133
      %v1151 = vunpack.c.l.b16 %v1134
      %v1152 = vpack.c.b16 %v1145, %v1144
      %v1153 = vpack.c.b16 %v1147, %v1146
      %v1154 = vpack.c.b16 %v1149, %v1148
      %v1155 = vpack.c.b16 %v1151, %v1150
      %v1157 = vunpack.c.l.b16 %v1135
      %v1158 = vpack.c.b16 %v1157, %v1157
      %v1159 = vrot.slane %v1158, 2
      %v1161 = vsel %vm785, %v1152, 0
      %v1164 = vsel %vm785, %v1153, 0
      %v1167 = vsel %vm785, %v1154, 0
      %v1170 = vsel %vm785, %v1155, 0
      %v1173 = vsel %vm798, %v1159, 0
      %1175 = vmatprep.subr.bf16.mxu0 0
      %1176 = vmatpush1.bf16.msra.mxu0 %v1173
      %1177 = vmatprep.subr.bf16.mxu0 0
      %1178 = vmatpush1.bf16.msra.mxu0 0
      %1179 = vmatprep.subr.bf16.mxu0 0
      %1180 = vmatpush1.bf16.msra.mxu0 0
      %1181 = vmatprep.subr.bf16.mxu0 0
      %1182 = vmatpush1.bf16.msra.mxu0 0
      %1183 = vmatprep.subr.bf16.mxu0 0
      %1184 = vmatpush1.bf16.msra.mxu0 0
      %1185 = vmatprep.subr.bf16.mxu0 0
      %1186 = vmatpush1.bf16.msra.mxu0 0
      %1187 = vmatprep.subr.bf16.mxu0 0
      %1188 = vmatpush1.bf16.msra.mxu0 0
      %1189 = vmatprep.subr.bf16.mxu0 0
      %1190 = vmatpush1.bf16.msra.mxu0 0
      %1191 = vmatprep.subr.bf16.mxu0 0
      %1192 = vmatpush1.bf16.msra.mxu0 0
      %1193 = vmatprep.subr.bf16.mxu0 0
      %1194 = vmatpush1.bf16.msra.mxu0 0
      %1195 = vmatprep.subr.bf16.mxu0 0
      %1196 = vmatpush1.bf16.msra.mxu0 0
      %1197 = vmatprep.subr.bf16.mxu0 0
      %1198 = vmatpush1.bf16.msra.mxu0 0
      %1199 = vmatprep.subr.bf16.mxu0 0
      %1200 = vmatpush1.bf16.msra.mxu0 0
      %1201 = vmatprep.subr.bf16.mxu0 0
      %1202 = vmatpush1.bf16.msra.mxu0 0
      %1203 = vmatprep.subr.bf16.mxu0 0
      %1204 = vmatpush1.bf16.msra.mxu0 0
      %1205 = vmatprep.subr.bf16.mxu0 0
      %1206 = vmatpush1.bf16.msra.mxu0 0
      %1207 = vmatprep.mubr.bf16.mxu0 0
      %1208 = vmatmul.mubr.bf16.gmra.mrb[0].mxu0 %v1161
      %v1209 = vpop.f32.mrb[0].mxu0
      %v1210 = vadd.f32 0.0, %v1209
      %v1211 = vpop.f32.mrb[0].mxu0
      %v1212 = vpop.f32.mrb[0].mxu0
      %v1213 = vadd.f32 0.0, %v1212
      %v1214 = vpop.f32.mrb[0].mxu0
      %1215 = vmatprep.mubr.bf16.mxu0 0
      %1216 = vmatmul.mubr.bf16.gmra.mrb[0].mxu0 %v1164
      %v1217 = vpop.f32.mrb[0].mxu0
      %v1218 = vadd.f32 0.0, %v1217
      %v1219 = vpop.f32.mrb[0].mxu0
      %v1220 = vpop.f32.mrb[0].mxu0
      %v1221 = vadd.f32 0.0, %v1220
      %v1222 = vpop.f32.mrb[0].mxu0
      %1223 = vmatprep.mubr.bf16.mxu0 0
      %1224 = vmatmul.mubr.bf16.gmra.mrb[0].mxu0 %v1167
      %v1225 = vpop.f32.mrb[0].mxu0
      %v1226 = vadd.f32 0.0, %v1225
      %v1227 = vpop.f32.mrb[0].mxu0
      %v1228 = vpop.f32.mrb[0].mxu0
      %v1229 = vadd.f32 0.0, %v1228
      %v1230 = vpop.f32.mrb[0].mxu0
      %1231 = vmatprep.mubr.bf16.mxu0 0
      %1232 = vmatmul.mubr.bf16.gmra.mrb[0].mxu0 %v1170
      %v1233 = vpop.f32.mrb[0].mxu0
      %v1234 = vadd.f32 0.0, %v1233
      %v1235 = vpop.f32.mrb[0].mxu0
      %v1236 = vpop.f32.mrb[0].mxu0
      %v1237 = vadd.f32 0.0, %v1236
      %v1238 = vpop.f32.mrb[0].mxu0
      %1239 = vdwg.mxu0
      %v1240 = vadd.f32 %v1119, %v1210
      %v1241 = vadd.f32 %v1120, %v1213
      %v1242 = vadd.f32 %v1121, %v1218
      %v1243 = vadd.f32 %v1122, %v1221
      %v1244 = vadd.f32 %v1123, %v1226
      %v1245 = vadd.f32 %v1124, %v1229
      %v1246 = vadd.f32 %v1125, %v1234
      %v1247 = vadd.f32 %v1126, %v1237
      %v1248 = vld [vmem:[%s585] sm:$0xf]
      %v1249 = vld [vmem:[%s585 + $0x4] sm:$0x1]
      %v1250 = vld [vmem:[%s585 + $0x8] sm:$0xf]
      %v1251 = vld [vmem:[%s585 + $0xc] sm:$0x1]
      %v1252 = vld [vmem:[%s585 + $0x10] sm:$0xf]
      %v1253 = vld [vmem:[%s585 + $0x14] sm:$0x1]
      %v1254 = vld [vmem:[%s585 + $0x18] sm:$0xf]
      %v1255 = vld [vmem:[%s585 + $0x1c] sm:$0x1]
      %v1256 = vld [vmem:[%s585 + $0x20] sm:$0xf]
      %v1257 = vld [vmem:[%s585 + $0x24] sm:$0x1]
      %v1258 = vld [vmem:[%s585 + $0x28] sm:$0xf]
      %v1259 = vld [vmem:[%s585 + $0x2c] sm:$0x1]
      %v1260 = vld [vmem:[%s585 + $0x30] sm:$0xf]
      %v1261 = vld [vmem:[%s585 + $0x34] sm:$0x1]
      %v1262 = vld [vmem:[%s585 + $0x38] sm:$0xf]
      %v1263 = vld [vmem:[%s585 + $0x3c] sm:$0x1]
      %v1265 = vshrl.u32 %v1248, 16
      %v1267 = vrot.slane %v1265, 4
      %v1268 = vshll.u32 %v1248, 16
      %v1270 = vrot.slane %v1268, 5
      %v1271 = vor.u32 %v1267, %v1270
      %v1272 = vrot.slane %v1271, 4
      %v1274 = vshll.u32 %v1249, 16
      %v1276 = vrot.slane %v1274, 5
      %v1277 = vsel %vm655, %v1272, %v1276
      %v1279 = vshrl.u32 %v1250, 16
      %v1281 = vrot.slane %v1279, 4
      %v1282 = vshll.u32 %v1250, 16
      %v1284 = vrot.slane %v1282, 5
      %v1285 = vor.u32 %v1281, %v1284
      %v1286 = vrot.slane %v1285, 4
      %v1288 = vshll.u32 %v1251, 16
      %v1290 = vrot.slane %v1288, 5
      %v1291 = vsel %vm655, %v1286, %v1290
      %v1293 = vshrl.u32 %v1252, 16
      %v1295 = vrot.slane %v1293, 4
      %v1296 = vshll.u32 %v1252, 16
      %v1298 = vrot.slane %v1296, 5
      %v1299 = vor.u32 %v1295, %v1298
      %v1300 = vrot.slane %v1299, 4
      %v1302 = vshll.u32 %v1253, 16
      %v1304 = vrot.slane %v1302, 5
      %v1305 = vsel %vm655, %v1300, %v1304
      %v1307 = vshrl.u32 %v1254, 16
      %v1309 = vrot.slane %v1307, 4
      %v1310 = vshll.u32 %v1254, 16
      %v1312 = vrot.slane %v1310, 5
      %v1313 = vor.u32 %v1309, %v1312
      %v1314 = vrot.slane %v1313, 4
      %v1316 = vshll.u32 %v1255, 16
      %v1318 = vrot.slane %v1316, 5
      %v1319 = vsel %vm655, %v1314, %v1318
      %v1321 = vshrl.u32 %v1256, 16
      %v1323 = vrot.slane %v1321, 4
      %v1324 = vshll.u32 %v1256, 16
      %v1326 = vrot.slane %v1324, 5
      %v1327 = vor.u32 %v1323, %v1326
      %v1328 = vrot.slane %v1327, 4
      %v1330 = vshll.u32 %v1257, 16
      %v1332 = vrot.slane %v1330, 5
      %v1333 = vsel %vm655, %v1328, %v1332
      %v1335 = vshrl.u32 %v1258, 16
      %v1337 = vrot.slane %v1335, 4
      %v1338 = vshll.u32 %v1258, 16
      %v1340 = vrot.slane %v1338, 5
      %v1341 = vor.u32 %v1337, %v1340
      %v1342 = vrot.slane %v1341, 4
      %v1344 = vshll.u32 %v1259, 16
      %v1346 = vrot.slane %v1344, 5
      %v1347 = vsel %vm655, %v1342, %v1346
      %v1349 = vshrl.u32 %v1260, 16
      %v1351 = vrot.slane %v1349, 4
      %v1352 = vshll.u32 %v1260, 16
      %v1354 = vrot.slane %v1352, 5
      %v1355 = vor.u32 %v1351, %v1354
      %v1356 = vrot.slane %v1355, 4
      %v1358 = vshll.u32 %v1261, 16
      %v1360 = vrot.slane %v1358, 5
      %v1361 = vsel %vm655, %v1356, %v1360
      %v1363 = vshrl.u32 %v1262, 16
      %v1365 = vrot.slane %v1363, 4
      %v1366 = vshll.u32 %v1262, 16
      %v1368 = vrot.slane %v1366, 5
      %v1369 = vor.u32 %v1365, %v1368
      %v1370 = vrot.slane %v1369, 4
      %v1372 = vshll.u32 %v1263, 16
      %v1374 = vrot.slane %v1372, 5
      %v1375 = vsel %vm655, %v1370, %v1374
      %v1376 = vld [vmem:[%s3 + $0x8] sm:$0x3]
      %v1377 = vunpack.c.l.b16 %v1277
      %v1378 = vunpack.c.l.b16 %v1291
      %v1379 = vunpack.c.l.b16 %v1305
      %v1380 = vunpack.c.l.b16 %v1319
      %v1381 = vunpack.c.l.b16 %v1333
      %v1382 = vunpack.c.l.b16 %v1347
      %v1383 = vunpack.c.l.b16 %v1361
      %v1384 = vunpack.c.l.b16 %v1375
      %v1385 = vpack.c.b16 %v1378, %v1377
      %v1386 = vpack.c.b16 %v1380, %v1379
      %v1387 = vpack.c.b16 %v1382, %v1381
      %v1388 = vpack.c.b16 %v1384, %v1383
      %v1390 = vsel %vm785, %v1385, 0
      %v1393 = vsel %vm785, %v1386, 0
      %v1396 = vsel %vm785, %v1387, 0
      %v1399 = vsel %vm785, %v1388, 0
      %v1402 = vsel %vm798, %v1376, 0
      %1404 = vmatprep.subr.bf16.mxu0 0
      %1405 = vmatpush1.bf16.msra.mxu0 %v1402
      %1406 = vmatprep.subr.bf16.mxu0 0
      %1407 = vmatpush1.bf16.msra.mxu0 0
      %1408 = vmatprep.subr.bf16.mxu0 0
      %1409 = vmatpush1.bf16.msra.mxu0 0
      %1410 = vmatprep.subr.bf16.mxu0 0
      %1411 = vmatpush1.bf16.msra.mxu0 0
      %1412 = vmatprep.subr.bf16.mxu0 0
      %1413 = vmatpush1.bf16.msra.mxu0 0
      %1414 = vmatprep.subr.bf16.mxu0 0
      %1415 = vmatpush1.bf16.msra.mxu0 0
      %1416 = vmatprep.subr.bf16.mxu0 0
      %1417 = vmatpush1.bf16.msra.mxu0 0
      %1418 = vmatprep.subr.bf16.mxu0 0
      %1419 = vmatpush1.bf16.msra.mxu0 0
      %1420 = vmatprep.subr.bf16.mxu0 0
      %1421 = vmatpush1.bf16.msra.mxu0 0
      %1422 = vmatprep.subr.bf16.mxu0 0
      %1423 = vmatpush1.bf16.msra.mxu0 0
      %1424 = vmatprep.subr.bf16.mxu0 0
      %1425 = vmatpush1.bf16.msra.mxu0 0
      %1426 = vmatprep.subr.bf16.mxu0 0
      %1427 = vmatpush1.bf16.msra.mxu0 0
      %1428 = vmatprep.subr.bf16.mxu0 0
      %1429 = vmatpush1.bf16.msra.mxu0 0
      %1430 = vmatprep.subr.bf16.mxu0 0
      %1431 = vmatpush1.bf16.msra.mxu0 0
      %1432 = vmatprep.subr.bf16.mxu0 0
      %1433 = vmatpush1.bf16.msra.mxu0 0
      %1434 = vmatprep.subr.bf16.mxu0 0
      %1435 = vmatpush1.bf16.msra.mxu0 0
      %1436 = vmatprep.mubr.bf16.mxu0 0
      %1437 = vmatmul.mubr.bf16.gmra.mrb[0].mxu0 %v1390
      %v1438 = vpop.f32.mrb[0].mxu0
      %v1439 = vadd.f32 0.0, %v1438
      %v1440 = vpop.f32.mrb[0].mxu0
      %v1441 = vpop.f32.mrb[0].mxu0
      %v1442 = vadd.f32 0.0, %v1441
      %v1443 = vpop.f32.mrb[0].mxu0
      %1444 = vmatprep.mubr.bf16.mxu0 0
      %1445 = vmatmul.mubr.bf16.gmra.mrb[0].mxu0 %v1393
      %v1446 = vpop.f32.mrb[0].mxu0
      %v1447 = vadd.f32 0.0, %v1446
      %v1448 = vpop.f32.mrb[0].mxu0
      %v1449 = vpop.f32.mrb[0].mxu0
      %v1450 = vadd.f32 0.0, %v1449
      %v1451 = vpop.f32.mrb[0].mxu0
      %1452 = vmatprep.mubr.bf16.mxu0 0
      %1453 = vmatmul.mubr.bf16.gmra.mrb[0].mxu0 %v1396
      %v1454 = vpop.f32.mrb[0].mxu0
      %v1455 = vadd.f32 0.0, %v1454
      %v1456 = vpop.f32.mrb[0].mxu0
      %v1457 = vpop.f32.mrb[0].mxu0
      %v1458 = vadd.f32 0.0, %v1457
      %v1459 = vpop.f32.mrb[0].mxu0
      %1460 = vmatprep.mubr.bf16.mxu0 0
      %1461 = vmatmul.mubr.bf16.gmra.mrb[0].mxu0 %v1399
      %v1462 = vpop.f32.mrb[0].mxu0
      %v1463 = vadd.f32 0.0, %v1462
      %v1464 = vpop.f32.mrb[0].mxu0
      %v1465 = vpop.f32.mrb[0].mxu0
      %v1466 = vadd.f32 0.0, %v1465
      %v1467 = vpop.f32.mrb[0].mxu0
      %1468 = vdwg.mxu0
      %v1469 = vadd.f32 %v1240, %v1439
      %v1470 = vadd.f32 %v1241, %v1442
      %v1471 = vadd.f32 %v1242, %v1447
      %v1472 = vadd.f32 %v1243, %v1450
      %v1473 = vadd.f32 %v1244, %v1455
      %v1474 = vadd.f32 %v1245, %v1458
      %v1475 = vadd.f32 %v1246, %v1463
      %v1476 = vadd.f32 %v1247, %v1466
      %v1477 = vld [vmem:[%s585] sm:$0xe]
      %v1478 = vld [vmem:[%s585 + $0x8] sm:$0xe]
      %v1479 = vld [vmem:[%s585 + $0x10] sm:$0xe]
      %v1480 = vld [vmem:[%s585 + $0x18] sm:$0xe]
      %v1481 = vld [vmem:[%s585 + $0x20] sm:$0xe]
      %v1482 = vld [vmem:[%s585 + $0x28] sm:$0xe]
      %v1483 = vld [vmem:[%s585 + $0x30] sm:$0xe]
      %v1484 = vld [vmem:[%s585 + $0x38] sm:$0xe]
      %v1501 = vrot.slane %v1477, 5
      %v1502 = vrot.slane %v1501, 4
      %v1503 = vrot.slane %v1249, 5
      %v1504 = vsel %vm993, %v1502, %v1503
      %v1505 = vrot.slane %v1478, 5
      %v1506 = vrot.slane %v1505, 4
      %v1507 = vrot.slane %v1251, 5
      %v1508 = vsel %vm993, %v1506, %v1507
      %v1509 = vrot.slane %v1479, 5
      %v1510 = vrot.slane %v1509, 4
      %v1511 = vrot.slane %v1253, 5
      %v1512 = vsel %vm993, %v1510, %v1511
      %v1513 = vrot.slane %v1480, 5
      %v1514 = vrot.slane %v1513, 4
      %v1515 = vrot.slane %v1255, 5
      %v1516 = vsel %vm993, %v1514, %v1515
      %v1517 = vrot.slane %v1481, 5
      %v1518 = vrot.slane %v1517, 4
      %v1519 = vrot.slane %v1257, 5
      %v1520 = vsel %vm993, %v1518, %v1519
      %v1521 = vrot.slane %v1482, 5
      %v1522 = vrot.slane %v1521, 4
      %v1523 = vrot.slane %v1259, 5
      %v1524 = vsel %vm993, %v1522, %v1523
      %v1525 = vrot.slane %v1483, 5
      %v1526 = vrot.slane %v1525, 4
      %v1527 = vrot.slane %v1261, 5
      %v1528 = vsel %vm993, %v1526, %v1527
      %v1529 = vrot.slane %v1484, 5
      %v1530 = vrot.slane %v1529, 4
      %v1531 = vrot.slane %v1263, 5
      %v1532 = vsel %vm993, %v1530, %v1531
      %v1533 = vld [vmem:[%s3 + $0x8] sm:$0xc]
      %v1534 = vunpack.c.l.b16 %v1504
      %v1535 = vunpack.c.l.b16 %v1508
      %v1536 = vunpack.c.l.b16 %v1512
      %v1537 = vunpack.c.l.b16 %v1516
      %v1538 = vunpack.c.l.b16 %v1520
      %v1539 = vunpack.c.l.b16 %v1524
      %v1540 = vunpack.c.l.b16 %v1528
      %v1541 = vunpack.c.l.b16 %v1532
      %v1542 = vpack.c.b16 %v1535, %v1534
      %v1543 = vpack.c.b16 %v1537, %v1536
      %v1544 = vpack.c.b16 %v1539, %v1538
      %v1545 = vpack.c.b16 %v1541, %v1540
      %v1547 = vunpack.c.l.b16 %v1533
      %v1548 = vpack.c.b16 %v1547, %v1547
      %v1549 = vrot.slane %v1548, 2
      %v1551 = vsel %vm785, %v1542, 0
      %v1554 = vsel %vm785, %v1543, 0
      %v1557 = vsel %vm785, %v1544, 0
      %v1560 = vsel %vm785, %v1545, 0
      %v1563 = vsel %vm798, %v1549, 0
      %1565 = vmatprep.subr.bf16.mxu0 0
      %1566 = vmatpush1.bf16.msra.mxu0 %v1563
      %1567 = vmatprep.subr.bf16.mxu0 0
      %1568 = vmatpush1.bf16.msra.mxu0 0
      %1569 = vmatprep.subr.bf16.mxu0 0
      %1570 = vmatpush1.bf16.msra.mxu0 0
      %1571 = vmatprep.subr.bf16.mxu0 0
      %1572 = vmatpush1.bf16.msra.mxu0 0
      %1573 = vmatprep.subr.bf16.mxu0 0
      %1574 = vmatpush1.bf16.msra.mxu0 0
      %1575 = vmatprep.subr.bf16.mxu0 0
      %1576 = vmatpush1.bf16.msra.mxu0 0
      %1577 = vmatprep.subr.bf16.mxu0 0
      %1578 = vmatpush1.bf16.msra.mxu0 0
      %1579 = vmatprep.subr.bf16.mxu0 0
      %1580 = vmatpush1.bf16.msra.mxu0 0
      %1581 = vmatprep.subr.bf16.mxu0 0
      %1582 = vmatpush1.bf16.msra.mxu0 0
      %1583 = vmatprep.subr.bf16.mxu0 0
      %1584 = vmatpush1.bf16.msra.mxu0 0
      %1585 = vmatprep.subr.bf16.mxu0 0
      %1586 = vmatpush1.bf16.msra.mxu0 0
      %1587 = vmatprep.subr.bf16.mxu0 0
      %1588 = vmatpush1.bf16.msra.mxu0 0
      %1589 = vmatprep.subr.bf16.mxu0 0
      %1590 = vmatpush1.bf16.msra.mxu0 0
      %1591 = vmatprep.subr.bf16.mxu0 0
      %1592 = vmatpush1.bf16.msra.mxu0 0
      %1593 = vmatprep.subr.bf16.mxu0 0
      %1594 = vmatpush1.bf16.msra.mxu0 0
      %1595 = vmatprep.subr.bf16.mxu0 0
      %1596 = vmatpush1.bf16.msra.mxu0 0
      %1597 = vmatprep.mubr.bf16.mxu0 0
      %1598 = vmatmul.mubr.bf16.gmra.mrb[0].mxu0 %v1551
      %v1599 = vpop.f32.mrb[0].mxu0
      %v1600 = vadd.f32 0.0, %v1599
      %v1601 = vpop.f32.mrb[0].mxu0
      %v1602 = vpop.f32.mrb[0].mxu0
      %v1603 = vadd.f32 0.0, %v1602
      %v1604 = vpop.f32.mrb[0].mxu0
      %1605 = vmatprep.mubr.bf16.mxu0 0
      %1606 = vmatmul.mubr.bf16.gmra.mrb[0].mxu0 %v1554
      %v1607 = vpop.f32.mrb[0].mxu0
      %v1608 = vadd.f32 0.0, %v1607
      %v1609 = vpop.f32.mrb[0].mxu0
      %v1610 = vpop.f32.mrb[0].mxu0
      %v1611 = vadd.f32 0.0, %v1610
      %v1612 = vpop.f32.mrb[0].mxu0
      %1613 = vmatprep.mubr.bf16.mxu0 0
      %1614 = vmatmul.mubr.bf16.gmra.mrb[0].mxu0 %v1557
      %v1615 = vpop.f32.mrb[0].mxu0
      %v1616 = vadd.f32 0.0, %v1615
      %v1617 = vpop.f32.mrb[0].mxu0
      %v1618 = vpop.f32.mrb[0].mxu0
      %v1619 = vadd.f32 0.0, %v1618
      %v1620 = vpop.f32.mrb[0].mxu0
      %1621 = vmatprep.mubr.bf16.mxu0 0
      %1622 = vmatmul.mubr.bf16.gmra.mrb[0].mxu0 %v1560
      %v1623 = vpop.f32.mrb[0].mxu0
      %v1624 = vadd.f32 0.0, %v1623
      %v1625 = vpop.f32.mrb[0].mxu0
      %v1626 = vpop.f32.mrb[0].mxu0
      %v1627 = vadd.f32 0.0, %v1626
      %v1628 = vpop.f32.mrb[0].mxu0
      %1629 = vdwg.mxu0
      %v1630 = vadd.f32 %v1469, %v1600
      %v1631 = vadd.f32 %v1470, %v1603
      %v1632 = vadd.f32 %v1471, %v1608
      %v1633 = vadd.f32 %v1472, %v1611
      %v1634 = vadd.f32 %v1473, %v1616
      %v1635 = vadd.f32 %v1474, %v1619
      %v1636 = vadd.f32 %v1475, %v1624
      %v1637 = vadd.f32 %v1476, %v1627
      %s1638 = scalar_lea.vmem [#allocation2], 16
      %v1639 = vld [vmem:[%s1638] sm:$0xf]
      %v1640 = vld [vmem:[%s1638 + $0x8] sm:$0xf]
      %v1641 = vld [vmem:[%s1638 + $0x10] sm:$0xf]
      %v1642 = vld [vmem:[%s1638 + $0x18] sm:$0xf]
      %v1643 = vld [vmem:[%s1638 + $0x20] sm:$0xf]
      %v1644 = vld [vmem:[%s1638 + $0x28] sm:$0xf]
      %v1645 = vld [vmem:[%s1638 + $0x30] sm:$0xf]
      %v1646 = vld [vmem:[%s1638 + $0x38] sm:$0xf]
      %v1647 = vld [vmem:[%s3 + $0xc] sm:$0x3]
      %v1656 = vunpack.c.l.b16 %v1639
      %v1657 = vunpack.c.l.b16 %v1640
      %v1658 = vunpack.c.l.b16 %v1641
      %v1659 = vunpack.c.l.b16 %v1642
      %v1660 = vunpack.c.l.b16 %v1643
      %v1661 = vunpack.c.l.b16 %v1644
      %v1662 = vunpack.c.l.b16 %v1645
      %v1663 = vunpack.c.l.b16 %v1646
      %v1664 = vpack.c.b16 %v1657, %v1656
      %v1665 = vpack.c.b16 %v1659, %v1658
      %v1666 = vpack.c.b16 %v1661, %v1660
      %v1667 = vpack.c.b16 %v1663, %v1662
      %v1669 = vsel %vm785, %v1664, 0
      %v1672 = vsel %vm785, %v1665, 0
      %v1675 = vsel %vm785, %v1666, 0
      %v1678 = vsel %vm785, %v1667, 0
      %v1681 = vsel %vm798, %v1647, 0
      %1683 = vmatprep.subr.bf16.mxu0 0
      %1684 = vmatpush1.bf16.msra.mxu0 %v1681
      %1685 = vmatprep.subr.bf16.mxu0 0
      %1686 = vmatpush1.bf16.msra.mxu0 0
      %1687 = vmatprep.subr.bf16.mxu0 0
      %1688 = vmatpush1.bf16.msra.mxu0 0
      %1689 = vmatprep.subr.bf16.mxu0 0
      %1690 = vmatpush1.bf16.msra.mxu0 0
      %1691 = vmatprep.subr.bf16.mxu0 0
      %1692 = vmatpush1.bf16.msra.mxu0 0
      %1693 = vmatprep.subr.bf16.mxu0 0
      %1694 = vmatpush1.bf16.msra.mxu0 0
      %1695 = vmatprep.subr.bf16.mxu0 0
      %1696 = vmatpush1.bf16.msra.mxu0 0
      %1697 = vmatprep.subr.bf16.mxu0 0
      %1698 = vmatpush1.bf16.msra.mxu0 0
      %1699 = vmatprep.subr.bf16.mxu0 0
      %1700 = vmatpush1.bf16.msra.mxu0 0
      %1701 = vmatprep.subr.bf16.mxu0 0
      %1702 = vmatpush1.bf16.msra.mxu0 0
      %1703 = vmatprep.subr.bf16.mxu0 0
      %1704 = vmatpush1.bf16.msra.mxu0 0
      %1705 = vmatprep.subr.bf16.mxu0 0
      %1706 = vmatpush1.bf16.msra.mxu0 0
      %1707 = vmatprep.subr.bf16.mxu0 0
      %1708 = vmatpush1.bf16.msra.mxu0 0
      %1709 = vmatprep.subr.bf16.mxu0 0
      %1710 = vmatpush1.bf16.msra.mxu0 0
      %1711 = vmatprep.subr.bf16.mxu0 0
      %1712 = vmatpush1.bf16.msra.mxu0 0
      %1713 = vmatprep.subr.bf16.mxu0 0
      %1714 = vmatpush1.bf16.msra.mxu0 0
      %1715 = vmatprep.mubr.bf16.mxu0 0
      %1716 = vmatmul.mubr.bf16.gmra.mrb[0].mxu0 %v1669
      %v1717 = vpop.f32.mrb[0].mxu0
      %v1718 = vadd.f32 0.0, %v1717
      %v1719 = vpop.f32.mrb[0].mxu0
      %v1720 = vpop.f32.mrb[0].mxu0
      %v1721 = vadd.f32 0.0, %v1720
      %v1722 = vpop.f32.mrb[0].mxu0
      %1723 = vmatprep.mubr.bf16.mxu0 0
      %1724 = vmatmul.mubr.bf16.gmra.mrb[0].mxu0 %v1672
      %v1725 = vpop.f32.mrb[0].mxu0
      %v1726 = vadd.f32 0.0, %v1725
      %v1727 = vpop.f32.mrb[0].mxu0
      %v1728 = vpop.f32.mrb[0].mxu0
      %v1729 = vadd.f32 0.0, %v1728
      %v1730 = vpop.f32.mrb[0].mxu0
      %1731 = vmatprep.mubr.bf16.mxu0 0
      %1732 = vmatmul.mubr.bf16.gmra.mrb[0].mxu0 %v1675
      %v1733 = vpop.f32.mrb[0].mxu0
      %v1734 = vadd.f32 0.0, %v1733
      %v1735 = vpop.f32.mrb[0].mxu0
      %v1736 = vpop.f32.mrb[0].mxu0
      %v1737 = vadd.f32 0.0, %v1736
      %v1738 = vpop.f32.mrb[0].mxu0
      %1739 = vmatprep.mubr.bf16.mxu0 0
      %1740 = vmatmul.mubr.bf16.gmra.mrb[0].mxu0 %v1678
      %v1741 = vpop.f32.mrb[0].mxu0
      %v1742 = vadd.f32 0.0, %v1741
      %v1743 = vpop.f32.mrb[0].mxu0
      %v1744 = vpop.f32.mrb[0].mxu0
      %v1745 = vadd.f32 0.0, %v1744
      %v1746 = vpop.f32.mrb[0].mxu0
      %1747 = vdwg.mxu0
      %v1748 = vadd.f32 %v1630, %v1718
      %v1749 = vadd.f32 %v1631, %v1721
      %v1750 = vadd.f32 %v1632, %v1726
      %v1751 = vadd.f32 %v1633, %v1729
      %v1752 = vadd.f32 %v1634, %v1734
      %v1753 = vadd.f32 %v1635, %v1737
      %v1754 = vadd.f32 %v1636, %v1742
      %v1755 = vadd.f32 %v1637, %v1745
      %v1756 = vld [vmem:[%s1638] sm:$0xf]
      %v1757 = vld [vmem:[%s1638 + $0x4] sm:$0x1]
      %v1758 = vld [vmem:[%s1638 + $0x8] sm:$0xf]
      %v1759 = vld [vmem:[%s1638 + $0xc] sm:$0x1]
      %v1760 = vld [vmem:[%s1638 + $0x10] sm:$0xf]
      %v1761 = vld [vmem:[%s1638 + $0x14] sm:$0x1]
      %v1762 = vld [vmem:[%s1638 + $0x18] sm:$0xf]
      %v1763 = vld [vmem:[%s1638 + $0x1c] sm:$0x1]
      %v1764 = vld [vmem:[%s1638 + $0x20] sm:$0xf]
      %v1765 = vld [vmem:[%s1638 + $0x24] sm:$0x1]
      %v1766 = vld [vmem:[%s1638 + $0x28] sm:$0xf]
      %v1767 = vld [vmem:[%s1638 + $0x2c] sm:$0x1]
      %v1768 = vld [vmem:[%s1638 + $0x30] sm:$0xf]
      %v1769 = vld [vmem:[%s1638 + $0x34] sm:$0x1]
      %v1770 = vld [vmem:[%s1638 + $0x38] sm:$0xf]
      %v1771 = vld [vmem:[%s1638 + $0x3c] sm:$0x1]
      %v1773 = vshrl.u32 %v1756, 16
      %v1775 = vrot.slane %v1773, 4
      %v1776 = vshll.u32 %v1756, 16
      %v1778 = vrot.slane %v1776, 5
      %v1779 = vor.u32 %v1775, %v1778
      %v1780 = vrot.slane %v1779, 4
      %v1782 = vshll.u32 %v1757, 16
      %v1784 = vrot.slane %v1782, 5
      %v1785 = vsel %vm655, %v1780, %v1784
      %v1787 = vshrl.u32 %v1758, 16
      %v1789 = vrot.slane %v1787, 4
      %v1790 = vshll.u32 %v1758, 16
      %v1792 = vrot.slane %v1790, 5
      %v1793 = vor.u32 %v1789, %v1792
      %v1794 = vrot.slane %v1793, 4
      %v1796 = vshll.u32 %v1759, 16
      %v1798 = vrot.slane %v1796, 5
      %v1799 = vsel %vm655, %v1794, %v1798
      %v1801 = vshrl.u32 %v1760, 16
      %v1803 = vrot.slane %v1801, 4
      %v1804 = vshll.u32 %v1760, 16
      %v1806 = vrot.slane %v1804, 5
      %v1807 = vor.u32 %v1803, %v1806
      %v1808 = vrot.slane %v1807, 4
      %v1810 = vshll.u32 %v1761, 16
      %v1812 = vrot.slane %v1810, 5
      %v1813 = vsel %vm655, %v1808, %v1812
      %v1815 = vshrl.u32 %v1762, 16
      %v1817 = vrot.slane %v1815, 4
      %v1818 = vshll.u32 %v1762, 16
      %v1820 = vrot.slane %v1818, 5
      %v1821 = vor.u32 %v1817, %v1820
      %v1822 = vrot.slane %v1821, 4
      %v1824 = vshll.u32 %v1763, 16
      %v1826 = vrot.slane %v1824, 5
      %v1827 = vsel %vm655, %v1822, %v1826
      %v1829 = vshrl.u32 %v1764, 16
      %v1831 = vrot.slane %v1829, 4
      %v1832 = vshll.u32 %v1764, 16
      %v1834 = vrot.slane %v1832, 5
      %v1835 = vor.u32 %v1831, %v1834
      %v1836 = vrot.slane %v1835, 4
      %v1838 = vshll.u32 %v1765, 16
      %v1840 = vrot.slane %v1838, 5
      %v1841 = vsel %vm655, %v1836, %v1840
      %v1843 = vshrl.u32 %v1766, 16
      %v1845 = vrot.slane %v1843, 4
      %v1846 = vshll.u32 %v1766, 16
      %v1848 = vrot.slane %v1846, 5
      %v1849 = vor.u32 %v1845, %v1848
      %v1850 = vrot.slane %v1849, 4
      %v1852 = vshll.u32 %v1767, 16
      %v1854 = vrot.slane %v1852, 5
      %v1855 = vsel %vm655, %v1850, %v1854
      %v1857 = vshrl.u32 %v1768, 16
      %v1859 = vrot.slane %v1857, 4
      %v1860 = vshll.u32 %v1768, 16
      %v1862 = vrot.slane %v1860, 5
      %v1863 = vor.u32 %v1859, %v1862
      %v1864 = vrot.slane %v1863, 4
      %v1866 = vshll.u32 %v1769, 16
      %v1868 = vrot.slane %v1866, 5
      %v1869 = vsel %vm655, %v1864, %v1868
      %v1871 = vshrl.u32 %v1770, 16
      %v1873 = vrot.slane %v1871, 4
      %v1874 = vshll.u32 %v1770, 16
      %v1876 = vrot.slane %v1874, 5
      %v1877 = vor.u32 %v1873, %v1876
      %v1878 = vrot.slane %v1877, 4
      %v1880 = vshll.u32 %v1771, 16
      %v1882 = vrot.slane %v1880, 5
      %v1883 = vsel %vm655, %v1878, %v1882
      %v1884 = vld [vmem:[%s3 + $0xc] sm:$0xc]
      %v1885 = vunpack.c.l.b16 %v1785
      %v1886 = vunpack.c.l.b16 %v1799
      %v1887 = vunpack.c.l.b16 %v1813
      %v1888 = vunpack.c.l.b16 %v1827
      %v1889 = vunpack.c.l.b16 %v1841
      %v1890 = vunpack.c.l.b16 %v1855
      %v1891 = vunpack.c.l.b16 %v1869
      %v1892 = vunpack.c.l.b16 %v1883
      %v1893 = vpack.c.b16 %v1886, %v1885
      %v1894 = vpack.c.b16 %v1888, %v1887
      %v1895 = vpack.c.b16 %v1890, %v1889
      %v1896 = vpack.c.b16 %v1892, %v1891
      %v1898 = vunpack.c.l.b16 %v1884
      %v1899 = vpack.c.b16 %v1898, %v1898
      %v1900 = vrot.slane %v1899, 2
      %v1902 = vsel %vm785, %v1893, 0
      %v1905 = vsel %vm785, %v1894, 0
      %v1908 = vsel %vm785, %v1895, 0
      %v1911 = vsel %vm785, %v1896, 0
      %v1914 = vsel %vm798, %v1900, 0
      %1916 = vmatprep.subr.bf16.mxu0 0
      %1917 = vmatpush1.bf16.msra.mxu0 %v1914
      %1918 = vmatprep.subr.bf16.mxu0 0
      %1919 = vmatpush1.bf16.msra.mxu0 0
      %1920 = vmatprep.subr.bf16.mxu0 0
      %1921 = vmatpush1.bf16.msra.mxu0 0
      %1922 = vmatprep.subr.bf16.mxu0 0
      %1923 = vmatpush1.bf16.msra.mxu0 0
      %1924 = vmatprep.subr.bf16.mxu0 0
      %1925 = vmatpush1.bf16.msra.mxu0 0
      %1926 = vmatprep.subr.bf16.mxu0 0
      %1927 = vmatpush1.bf16.msra.mxu0 0
      %1928 = vmatprep.subr.bf16.mxu0 0
      %1929 = vmatpush1.bf16.msra.mxu0 0
      %1930 = vmatprep.subr.bf16.mxu0 0
      %1931 = vmatpush1.bf16.msra.mxu0 0
      %1932 = vmatprep.subr.bf16.mxu0 0
      %1933 = vmatpush1.bf16.msra.mxu0 0
      %1934 = vmatprep.subr.bf16.mxu0 0
      %1935 = vmatpush1.bf16.msra.mxu0 0
      %1936 = vmatprep.subr.bf16.mxu0 0
      %1937 = vmatpush1.bf16.msra.mxu0 0
      %1938 = vmatprep.subr.bf16.mxu0 0
      %1939 = vmatpush1.bf16.msra.mxu0 0
      %1940 = vmatprep.subr.bf16.mxu0 0
      %1941 = vmatpush1.bf16.msra.mxu0 0
      %1942 = vmatprep.subr.bf16.mxu0 0
      %1943 = vmatpush1.bf16.msra.mxu0 0
      %1944 = vmatprep.subr.bf16.mxu0 0
      %1945 = vmatpush1.bf16.msra.mxu0 0
      %1946 = vmatprep.subr.bf16.mxu0 0
      %1947 = vmatpush1.bf16.msra.mxu0 0
      %1948 = vmatprep.mubr.bf16.mxu0 0
      %1949 = vmatmul.mubr.bf16.gmra.mrb[0].mxu0 %v1902
      %v1950 = vpop.f32.mrb[0].mxu0
      %v1951 = vadd.f32 0.0, %v1950
      %v1952 = vpop.f32.mrb[0].mxu0
      %v1953 = vpop.f32.mrb[0].mxu0
      %v1954 = vadd.f32 0.0, %v1953
      %v1955 = vpop.f32.mrb[0].mxu0
      %1956 = vmatprep.mubr.bf16.mxu0 0
      %1957 = vmatmul.mubr.bf16.gmra.mrb[0].mxu0 %v1905
      %v1958 = vpop.f32.mrb[0].mxu0
      %v1959 = vadd.f32 0.0, %v1958
      %v1960 = vpop.f32.mrb[0].mxu0
      %v1961 = vpop.f32.mrb[0].mxu0
      %v1962 = vadd.f32 0.0, %v1961
      %v1963 = vpop.f32.mrb[0].mxu0
      %1964 = vmatprep.mubr.bf16.mxu0 0
      %1965 = vmatmul.mubr.bf16.gmra.mrb[0].mxu0 %v1908
      %v1966 = vpop.f32.mrb[0].mxu0
      %v1967 = vadd.f32 0.0, %v1966
      %v1968 = vpop.f32.mrb[0].mxu0
      %v1969 = vpop.f32.mrb[0].mxu0
      %v1970 = vadd.f32 0.0, %v1969
      %v1971 = vpop.f32.mrb[0].mxu0
      %1972 = vmatprep.mubr.bf16.mxu0 0
      %1973 = vmatmul.mubr.bf16.gmra.mrb[0].mxu0 %v1911
      %v1974 = vpop.f32.mrb[0].mxu0
      %v1975 = vadd.f32 0.0, %v1974
      %v1976 = vpop.f32.mrb[0].mxu0
      %v1977 = vpop.f32.mrb[0].mxu0
      %v1978 = vadd.f32 0.0, %v1977
      %v1979 = vpop.f32.mrb[0].mxu0
      %1980 = vdwg.mxu0
      %v1981 = vadd.f32 %v1748, %v1951
      %v1982 = vadd.f32 %v1749, %v1954
      %v1983 = vadd.f32 %v1750, %v1959
      %v1984 = vadd.f32 %v1751, %v1962
      %v1985 = vadd.f32 %v1752, %v1967
      %v1986 = vadd.f32 %v1753, %v1970
      %v1987 = vadd.f32 %v1754, %v1975
      %v1988 = vadd.f32 %v1755, %v1978
      %v1989 = vld [vmem:[%s1638] sm:$0xe]
      %v1990 = vld [vmem:[%s1638 + $0x8] sm:$0xe]
      %v1991 = vld [vmem:[%s1638 + $0x10] sm:$0xe]
      %v1992 = vld [vmem:[%s1638 + $0x18] sm:$0xe]
      %v1993 = vld [vmem:[%s1638 + $0x20] sm:$0xe]
      %v1994 = vld [vmem:[%s1638 + $0x28] sm:$0xe]
      %v1995 = vld [vmem:[%s1638 + $0x30] sm:$0xe]
      %v1996 = vld [vmem:[%s1638 + $0x38] sm:$0xe]
      %v2013 = vrot.slane %v1989, 5
      %v2014 = vrot.slane %v2013, 4
      %v2015 = vrot.slane %v1757, 5
      %v2016 = vsel %vm993, %v2014, %v2015
      %v2017 = vrot.slane %v1990, 5
      %v2018 = vrot.slane %v2017, 4
      %v2019 = vrot.slane %v1759, 5
      %v2020 = vsel %vm993, %v2018, %v2019
      %v2021 = vrot.slane %v1991, 5
      %v2022 = vrot.slane %v2021, 4
      %v2023 = vrot.slane %v1761, 5
      %v2024 = vsel %vm993, %v2022, %v2023
      %v2025 = vrot.slane %v1992, 5
      %v2026 = vrot.slane %v2025, 4
      %v2027 = vrot.slane %v1763, 5
      %v2028 = vsel %vm993, %v2026, %v2027
      %v2029 = vrot.slane %v1993, 5
      %v2030 = vrot.slane %v2029, 4
      %v2031 = vrot.slane %v1765, 5
      %v2032 = vsel %vm993, %v2030, %v2031
      %v2033 = vrot.slane %v1994, 5
      %v2034 = vrot.slane %v2033, 4
      %v2035 = vrot.slane %v1767, 5
      %v2036 = vsel %vm993, %v2034, %v2035
      %v2037 = vrot.slane %v1995, 5
      %v2038 = vrot.slane %v2037, 4
      %v2039 = vrot.slane %v1769, 5
      %v2040 = vsel %vm993, %v2038, %v2039
      %v2041 = vrot.slane %v1996, 5
      %v2042 = vrot.slane %v2041, 4
      %v2043 = vrot.slane %v1771, 5
      %v2044 = vsel %vm993, %v2042, %v2043
      %v2045 = vld [vmem:[%s3 + $0x10] sm:$0x3]
      %v2046 = vunpack.c.l.b16 %v2016
      %v2047 = vunpack.c.l.b16 %v2020
      %v2048 = vunpack.c.l.b16 %v2024
      %v2049 = vunpack.c.l.b16 %v2028
      %v2050 = vunpack.c.l.b16 %v2032
      %v2051 = vunpack.c.l.b16 %v2036
      %v2052 = vunpack.c.l.b16 %v2040
      %v2053 = vunpack.c.l.b16 %v2044
      %v2054 = vpack.c.b16 %v2047, %v2046
      %v2055 = vpack.c.b16 %v2049, %v2048
      %v2056 = vpack.c.b16 %v2051, %v2050
      %v2057 = vpack.c.b16 %v2053, %v2052
      %v2059 = vsel %vm785, %v2054, 0
      %v2062 = vsel %vm785, %v2055, 0
      %v2065 = vsel %vm785, %v2056, 0
      %v2068 = vsel %vm785, %v2057, 0
      %v2071 = vsel %vm798, %v2045, 0
      %2073 = vmatprep.subr.bf16.mxu0 0
      %2074 = vmatpush1.bf16.msra.mxu0 %v2071
      %2075 = vmatprep.subr.bf16.mxu0 0
      %2076 = vmatpush1.bf16.msra.mxu0 0
      %2077 = vmatprep.subr.bf16.mxu0 0
      %2078 = vmatpush1.bf16.msra.mxu0 0
      %2079 = vmatprep.subr.bf16.mxu0 0
      %2080 = vmatpush1.bf16.msra.mxu0 0
      %2081 = vmatprep.subr.bf16.mxu0 0
      %2082 = vmatpush1.bf16.msra.mxu0 0
      %2083 = vmatprep.subr.bf16.mxu0 0
      %2084 = vmatpush1.bf16.msra.mxu0 0
      %2085 = vmatprep.subr.bf16.mxu0 0
      %2086 = vmatpush1.bf16.msra.mxu0 0
      %2087 = vmatprep.subr.bf16.mxu0 0
      %2088 = vmatpush1.bf16.msra.mxu0 0
      %2089 = vmatprep.subr.bf16.mxu0 0
      %2090 = vmatpush1.bf16.msra.mxu0 0
      %2091 = vmatprep.subr.bf16.mxu0 0
      %2092 = vmatpush1.bf16.msra.mxu0 0
      %2093 = vmatprep.subr.bf16.mxu0 0
      %2094 = vmatpush1.bf16.msra.mxu0 0
      %2095 = vmatprep.subr.bf16.mxu0 0
      %2096 = vmatpush1.bf16.msra.mxu0 0
      %2097 = vmatprep.subr.bf16.mxu0 0
      %2098 = vmatpush1.bf16.msra.mxu0 0
      %2099 = vmatprep.subr.bf16.mxu0 0
      %2100 = vmatpush1.bf16.msra.mxu0 0
      %2101 = vmatprep.subr.bf16.mxu0 0
      %2102 = vmatpush1.bf16.msra.mxu0 0
      %2103 = vmatprep.subr.bf16.mxu0 0
      %2104 = vmatpush1.bf16.msra.mxu0 0
      %2105 = vmatprep.mubr.bf16.mxu0 0
      %2106 = vmatmul.mubr.bf16.gmra.mrb[0].mxu0 %v2059
      %v2107 = vpop.f32.mrb[0].mxu0
      %v2108 = vadd.f32 0.0, %v2107
      %v2109 = vpop.f32.mrb[0].mxu0
      %v2110 = vpop.f32.mrb[0].mxu0
      %v2111 = vadd.f32 0.0, %v2110
      %v2112 = vpop.f32.mrb[0].mxu0
      %2113 = vmatprep.mubr.bf16.mxu0 0
      %2114 = vmatmul.mubr.bf16.gmra.mrb[0].mxu0 %v2062
      %v2115 = vpop.f32.mrb[0].mxu0
      %v2116 = vadd.f32 0.0, %v2115
      %v2117 = vpop.f32.mrb[0].mxu0
      %v2118 = vpop.f32.mrb[0].mxu0
      %v2119 = vadd.f32 0.0, %v2118
      %v2120 = vpop.f32.mrb[0].mxu0
      %2121 = vmatprep.mubr.bf16.mxu0 0
      %2122 = vmatmul.mubr.bf16.gmra.mrb[0].mxu0 %v2065
      %v2123 = vpop.f32.mrb[0].mxu0
      %v2124 = vadd.f32 0.0, %v2123
      %v2125 = vpop.f32.mrb[0].mxu0
      %v2126 = vpop.f32.mrb[0].mxu0
      %v2127 = vadd.f32 0.0, %v2126
      %v2128 = vpop.f32.mrb[0].mxu0
      %2129 = vmatprep.mubr.bf16.mxu0 0
      %2130 = vmatmul.mubr.bf16.gmra.mrb[0].mxu0 %v2068
      %v2131 = vpop.f32.mrb[0].mxu0
      %v2132 = vadd.f32 0.0, %v2131
      %v2133 = vpop.f32.mrb[0].mxu0
      %v2134 = vpop.f32.mrb[0].mxu0
      %v2135 = vadd.f32 0.0, %v2134
      %v2136 = vpop.f32.mrb[0].mxu0
      %2137 = vdwg.mxu0
      %v2138 = vadd.f32 %v1981, %v2108
      %v2139 = vadd.f32 %v1982, %v2111
      %v2140 = vadd.f32 %v1983, %v2116
      %v2141 = vadd.f32 %v1984, %v2119
      %v2142 = vadd.f32 %v1985, %v2124
      %v2143 = vadd.f32 %v1986, %v2127
      %v2144 = vadd.f32 %v1987, %v2132
      %v2145 = vadd.f32 %v1988, %v2135
      %v2146 = vld [vmem:[%s4] sm:$0x1]
      %v2148 = vlaneseq
      %v2149 = vshrl.u32 %v2148, 7
      %v2150 = vsub.s32 0, %v2149
      %v2151 = vrot.slane %v2146, %v2150
      %v2153 = vadd.f32 %v2138, %v2151
      %v2154 = vadd.f32 %v2139, %v2151
      %v2155 = vadd.f32 %v2140, %v2151
      %v2156 = vadd.f32 %v2141, %v2151
      %v2157 = vadd.f32 %v2142, %v2151
      %v2158 = vadd.f32 %v2143, %v2151
      %v2159 = vadd.f32 %v2144, %v2151
      %v2160 = vadd.f32 %v2145, %v2151
      %v2161 = vmax.f32 %v2153, 0.0
      %v2162 = vmax.f32 %v2154, 0.0
      %v2163 = vmax.f32 %v2155, 0.0
      %v2164 = vmax.f32 %v2156, 0.0
      %v2165 = vmax.f32 %v2157, 0.0
      %v2166 = vmax.f32 %v2158, 0.0
      %v2167 = vmax.f32 %v2159, 0.0
      %v2168 = vmax.f32 %v2160, 0.0
      %v2169 = vpack.c.bf16 %v2162, %v2161
      %v2170 = vpack.c.bf16 %v2164, %v2163
      %v2171 = vpack.c.bf16 %v2166, %v2165
      %v2172 = vpack.c.bf16 %v2168, %v2167
      %v2173 = vld [vmem:[%s5] sm:$0x3]
      %v2174 = vld [vmem:[%s6] sm:$0x1]
      %v2176 = vlaneseq
      %v2177 = vshrl.u32 %v2176, 7
      %v2178 = vsub.s32 0, %v2177
      %v2179 = vrot.slane %v2174, %v2178
      %v2182 = vsel %vm785, %v2169, 0
      %v2185 = vsel %vm785, %v2170, 0
      %v2188 = vsel %vm785, %v2171, 0
      %v2191 = vsel %vm785, %v2172, 0
      %v2194 = vsel %vm798, %v2173, 0
      %2196 = vmatprep.subr.bf16.mxu0 0
      %2197 = vmatpush1.bf16.msra.mxu0 %v2194
      %2198 = vmatprep.subr.bf16.mxu0 0
      %2199 = vmatpush1.bf16.msra.mxu0 0
      %2200 = vmatprep.subr.bf16.mxu0 0
      %2201 = vmatpush1.bf16.msra.mxu0 0
      %2202 = vmatprep.subr.bf16.mxu0 0
      %2203 = vmatpush1.bf16.msra.mxu0 0
      %2204 = vmatprep.subr.bf16.mxu0 0
      %2205 = vmatpush1.bf16.msra.mxu0 0
      %2206 = vmatprep.subr.bf16.mxu0 0
      %2207 = vmatpush1.bf16.msra.mxu0 0
      %2208 = vmatprep.subr.bf16.mxu0 0
      %2209 = vmatpush1.bf16.msra.mxu0 0
      %2210 = vmatprep.subr.bf16.mxu0 0
      %2211 = vmatpush1.bf16.msra.mxu0 0
      %2212 = vmatprep.subr.bf16.mxu0 0
      %2213 = vmatpush1.bf16.msra.mxu0 0
      %2214 = vmatprep.subr.bf16.mxu0 0
      %2215 = vmatpush1.bf16.msra.mxu0 0
      %2216 = vmatprep.subr.bf16.mxu0 0
      %2217 = vmatpush1.bf16.msra.mxu0 0
      %2218 = vmatprep.subr.bf16.mxu0 0
      %2219 = vmatpush1.bf16.msra.mxu0 0
      %2220 = vmatprep.subr.bf16.mxu0 0
      %2221 = vmatpush1.bf16.msra.mxu0 0
      %2222 = vmatprep.subr.bf16.mxu0 0
      %2223 = vmatpush1.bf16.msra.mxu0 0
      %2224 = vmatprep.subr.bf16.mxu0 0
      %2225 = vmatpush1.bf16.msra.mxu0 0
      %2226 = vmatprep.subr.bf16.mxu0 0
      %2227 = vmatpush1.bf16.msra.mxu0 0
      %2228 = vmatprep.mubr.bf16.mxu0 0
      %2229 = vmatmul.mubr.bf16.gmra.mrb[0].mxu0 %v2182
      %v2230 = vpop.f32.mrb[0].mxu0
      %v2231 = vadd.f32 %v2179, %v2230
      %v2232 = vpop.f32.mrb[0].mxu0
      %v2233 = vpop.f32.mrb[0].mxu0
      %v2234 = vadd.f32 %v2179, %v2233
      %v2235 = vpop.f32.mrb[0].mxu0
      %2236 = vmatprep.mubr.bf16.mxu0 0
      %2237 = vmatmul.mubr.bf16.gmra.mrb[0].mxu0 %v2185
      %v2238 = vpop.f32.mrb[0].mxu0
      %v2239 = vadd.f32 %v2179, %v2238
      %v2240 = vpop.f32.mrb[0].mxu0
      %v2241 = vpop.f32.mrb[0].mxu0
      %v2242 = vadd.f32 %v2179, %v2241
      %v2243 = vpop.f32.mrb[0].mxu0
      %2244 = vmatprep.mubr.bf16.mxu0 0
      %2245 = vmatmul.mubr.bf16.gmra.mrb[0].mxu0 %v2188
      %v2246 = vpop.f32.mrb[0].mxu0
      %v2247 = vadd.f32 %v2179, %v2246
      %v2248 = vpop.f32.mrb[0].mxu0
      %v2249 = vpop.f32.mrb[0].mxu0
      %v2250 = vadd.f32 %v2179, %v2249
      %v2251 = vpop.f32.mrb[0].mxu0
      %2252 = vmatprep.mubr.bf16.mxu0 0
      %2253 = vmatmul.mubr.bf16.gmra.mrb[0].mxu0 %v2191
      %v2254 = vpop.f32.mrb[0].mxu0
      %v2255 = vadd.f32 %v2179, %v2254
      %v2256 = vpop.f32.mrb[0].mxu0
      %v2257 = vpop.f32.mrb[0].mxu0
      %v2258 = vadd.f32 %v2179, %v2257
      %v2259 = vpop.f32.mrb[0].mxu0
      %2260 = vdwg.mxu0
      %v2261 = vunpack.c.l.bf16 %v280
      %v2262 = vunpack.c.l.bf16 %v281
      %v2263 = vunpack.c.l.bf16 %v282
      %v2264 = vunpack.c.l.bf16 %v283
      %v2265 = vunpack.c.l.bf16 %v284
      %v2266 = vunpack.c.l.bf16 %v285
      %v2267 = vunpack.c.l.bf16 %v286
      %v2268 = vunpack.c.l.bf16 %v287
      %v2269 = vadd.f32 %v2231, %v2261
      %v2270 = vadd.f32 %v2234, %v2262
      %v2271 = vadd.f32 %v2239, %v2263
      %v2272 = vadd.f32 %v2242, %v2264
      %v2273 = vadd.f32 %v2247, %v2265
      %v2274 = vadd.f32 %v2250, %v2266
      %v2275 = vadd.f32 %v2255, %v2267
      %v2276 = vadd.f32 %v2258, %v2268
      %v2277 = vmax.f32 %v2269, 0.0
      %v2278 = vmax.f32 %v2270, 0.0
      %v2279 = vmax.f32 %v2271, 0.0
      %v2280 = vmax.f32 %v2272, 0.0
      %v2281 = vmax.f32 %v2273, 0.0
      %v2282 = vmax.f32 %v2274, 0.0
      %v2283 = vmax.f32 %v2275, 0.0
      %v2284 = vmax.f32 %v2276, 0.0
      %v2285 = vpack.c.bf16 %v2278, %v2277
      %v2286 = vpack.c.bf16 %v2280, %v2279
      %v2287 = vpack.c.bf16 %v2282, %v2281
      %v2288 = vpack.c.bf16 %v2284, %v2283
      %v2293 = vunpack.c.l.b16 %v2285
      %v2294 = vunpack.c.h.b16 %v2285
      %v2295 = vunpack.c.l.b16 %v2286
      %v2296 = vunpack.c.h.b16 %v2286
      %v2297 = vunpack.c.l.b16 %v2287
      %v2298 = vunpack.c.h.b16 %v2287
      %v2299 = vunpack.c.l.b16 %v2288
      %v2300 = vunpack.c.h.b16 %v2288
      %v2301 = vpack.c.b16 %v2293, %v2293
      %v2302 = vpack.c.b16 %v2294, %v2294
      %v2303 = vpack.c.b16 %v2295, %v2295
      %v2304 = vpack.c.b16 %v2296, %v2296
      %v2305 = vpack.c.b16 %v2297, %v2297
      %v2306 = vpack.c.b16 %v2298, %v2298
      %v2307 = vpack.c.b16 %v2299, %v2299
      %v2308 = vpack.c.b16 %v2300, %v2300
      %vm2317 = vcmask 125952
      %2318 = vst.msk [vmem:[%s278] sm:$0xf] %vm2317, %v2301
      %2319 = vst.msk [vmem:[%s278 + $0x4] sm:$0xf] %vm2317, %v2302
      %2320 = vst.msk [vmem:[%s278 + $0x8] sm:$0xf] %vm2317, %v2303
      %2321 = vst.msk [vmem:[%s278 + $0xc] sm:$0xf] %vm2317, %v2304
      %2322 = vst.msk [vmem:[%s278 + $0x10] sm:$0xf] %vm2317, %v2305
      %2323 = vst.msk [vmem:[%s278 + $0x14] sm:$0xf] %vm2317, %v2306
      %2324 = vst.msk [vmem:[%s278 + $0x18] sm:$0xf] %vm2317, %v2307
      %2325 = vst.msk [vmem:[%s278 + $0x1c] sm:$0xf] %vm2317, %v2308
      %p2326 = scmp.lt.s32.totalorder %s18, 1
      %s2327 = scalar_select %p2326, %s18, 1
      %s2328 = smul.addr %s2327, 8
      %s2329 = smul.addr %s2328, 4
      %s2330 = scalar_lea.vmem %s7, %s2329
      // Predicated region
      $region49: #{tpu_custom_call.1} parent=47 // pred_check
        %p2331 = pneg %p188
      $region50: #{tpu_custom_call.1} parent=47 // pred_check_branch
        %2333 = sbr.rel (%p2331) target = $region52
      $region51: #{tpu_custom_call.1} parent=47 // pred_region
        _
      $region52: #{tpu_custom_call.1} parent=47 // pred_fallthru
        _
    $region48: #{tpu_custom_call.1} parent=5 // pred_fallthru
      _
    %p2334 = scmp.le.s32.totalorder 2, %s13
    // Predicated region
    $region53: #{tpu_custom_call.1} parent=5 // pred_check
      %p2335 = pneg %p2334
    $region54: #{tpu_custom_call.1} parent=5 // pred_check_branch
      %2337 = sbr.rel (%p2335) target = $region56
    $region55: #{tpu_custom_call.1} parent=5 // pred_region
      %s2338 = ssub.s32 %s13, 2
      // Predicated region
      $region57: #{tpu_custom_call.1} parent=55 // pred_check
        %p2339 = pneg %p194
      $region58: #{tpu_custom_call.1} parent=55 // pred_check_branch
        %2341 = sbr.rel (%p2339) target = $region60
      $region59: #{tpu_custom_call.1} parent=55 // pred_region
        %p2342 = scmp.lt.s32.totalorder %s19, 1
        %s2343 = scalar_select %p2342, %s19, 1
        %s2344 = smul.addr %s2343, 8
        %s2345 = smul.addr %s2344, 4
        %s2346 = scalar_lea.vmem %s7, %s2345
      $region60: #{tpu_custom_call.1} parent=55 // pred_fallthru
        _
    $region56: #{tpu_custom_call.1} parent=5 // pred_fallthru
      _
  $region6: #{tpu_custom_call.1} parent=0 // loop_footer
    %s17 = sadd.s32 1, %s13
  $region7: #{tpu_custom_call.1} parent=0 // loop_footer_branch
    %12 = sbr.rel target = $region3
  $region8: #{tpu_custom_call.1} parent=0 // loop_exit
    _

</llo_original>
